<compile_context>
chip_gen: v6e
topology: v6e:2x2x1
jax: 0.10.0
libtpu: 0.0.40
codegen_flags: <defaults>
</compile_context>

<pallas_src>
import functools

import jax
import jax.numpy as jnp
from jax.experimental import pallas as pl
from jax.experimental.pallas import tpu as pltpu

SUBLANE = 8
MAX_TILE_B = 512


def _round_up(x, m):
    return (x + m - 1) // m * m


def _cdiv(a, b):
    return -(-a // b)


# ------------------------------ Pallas kernel -------------------------------

def _mlp_kernel(x_ref, w_in_ref, b_in_ref, w2_ref, b2_ref, w1_ref, b1_ref, o_ref):
    # x: [tb, K] bf16; weights bf16; biases f32 [1, *]; output f32 [tb, out].
    h = jnp.dot(x_ref[...], w_in_ref[...], preferred_element_type=jnp.float32)
    h = jnp.maximum(h + b_in_ref[...], 0.0)
    h = jnp.dot(h.astype(jnp.bfloat16), w2_ref[...],
                preferred_element_type=jnp.float32)
    h = jnp.maximum(h + b2_ref[...], 0.0)
    y = jnp.dot(h.astype(jnp.bfloat16), w1_ref[...],
                preferred_element_type=jnp.float32)
    y = y + b1_ref[...]
    # sigmoid: exp on EUP, reciprocal on EUP (approx) -- keeps VALU free.
    o_ref[...] = pl.reciprocal(1.0 + jnp.exp(-y), approx=True)


def _fused_mlp(x_p, w_in, b_in, w2, b2, w1, b1, tb):
    bp, k = x_p.shape
    h = w_in.shape[1]
    o = w1.shape[1]
    n_tiles = bp // tb

    weight_bytes = sum(int(a.size) * a.dtype.itemsize
                       for a in (w_in, b_in, w2, b2, w1, b1))
    cost = pl.CostEstimate(
        flops=2 * bp * (k * h + h * h + h * o),
        transcendentals=bp * o,
        bytes_accessed=int(x_p.size) * x_p.dtype.itemsize + weight_bytes + bp * o * 4,
    )

    return pl.pallas_call(
        _mlp_kernel,
        out_shape=jax.ShapeDtypeStruct((bp, o), jnp.float32),
        grid_spec=pltpu.PrefetchScalarGridSpec(
            num_scalar_prefetch=0,
            grid=(n_tiles,),
            in_specs=[
                pl.BlockSpec((tb, k), lambda i: (i, 0)),   # x tile streams, full K
                pl.BlockSpec((k, h), lambda i: (0, 0)),    # weights/biases resident
                pl.BlockSpec((1, h), lambda i: (0, 0)),
                pl.BlockSpec((h, h), lambda i: (0, 0)),
                pl.BlockSpec((1, h), lambda i: (0, 0)),
                pl.BlockSpec((h, o), lambda i: (0, 0)),
                pl.BlockSpec((1, o), lambda i: (0, 0)),
            ],
            out_specs=pl.BlockSpec((tb, o), lambda i: (i, 0)),  # true 784 width
        ),
        compiler_params=pltpu.CompilerParams(
            dimension_semantics=("parallel",),
            vmem_limit_bytes=24 * 1024 * 1024,
        ),
        cost_estimate=cost,
    )(x_p, w_in, b_in, w2, b2, w1, b1)


# ---------------------------- parameter handling ----------------------------

def init_params(key, out_size=28, out_channels=1, fc_size=400, latent_dims=10,
                latent_classes=1):
    """Weights stored as [in, out] (transpose of PyTorch Linear's [out, in])."""
    out_flat = out_size * out_size * out_channels

    def linear(k, fin, fout):
        k1, k2 = jax.random.split(k)
        bound = 1.0 / (fin ** 0.5)  # PyTorch default uniform init
        w = jax.random.uniform(k1, (fin, fout), jnp.float32, -bound, bound)
        b = jax.random.uniform(k2, (1, fout), jnp.float32, -bound, bound)
        return w, b

    keys = jax.random.split(key, latent_classes + 2)
    return {
        "fc_in": [linear(keys[i], latent_dims, fc_size) for i in range(latent_classes)],
        "fc2": linear(keys[latent_classes], fc_size, fc_size),
        "fc1": linear(keys[latent_classes + 1], fc_size, out_flat),
    }


def prepare_params(params):
    """Cast weights to bf16 for single-pass MXU issue; keep biases in f32
    (they are added to the f32 accumulator). No shape padding."""
    def cvt(wb):
        w, b = wb
        return w.astype(jnp.bfloat16), b.astype(jnp.float32)

    return {
        "fc_in": [cvt(wb) for wb in params["fc_in"]],
        "fc2": cvt(params["fc2"]),
        "fc1": cvt(params["fc1"]),
    }


# --------------------------------- forward ----------------------------------

def decoder_mlp_forward(x, kernel_params, class_nr=0, *, out_size=28, out_channels=1):
    # class_nr mirrors nn.ModuleList indexing and must stay a static Python int.
    assert isinstance(class_nr, int), "class_nr must be a static Python int"
    w_in, b_in = kernel_params["fc_in"][class_nr]
    w2, b2 = kernel_params["fc2"]
    w1, b1 = kernel_params["fc1"]

    b = x.shape[0]
    out_flat = out_size * out_size * out_channels

    # Tile/grid selection: bound batch over-padding to < one sublane-rounded
    # tile, and give >= 2 grid steps (v7x megacore + pipeline overlap) whenever
    # there is more than one sublane of rows.
    b8 = _round_up(b, SUBLANE)
    n_tiles = 1 if b8 <= SUBLANE else max(2, _cdiv(b8, MAX_TILE_B))
    tb = _round_up(_cdiv(b8, n_tiles), SUBLANE)
    bp = tb * n_tiles

    x_bf = x.astype(jnp.bfloat16)
    if bp != b:
        x_bf = jnp.pad(x_bf, ((0, bp - b), (0, 0)))   # row pad only, K untouched

    y = _fused_mlp(x_bf, w_in, b_in, w2, b2, w1, b1, tb)
    if bp != b:
        y = y[:b]
    # PyTorch x.view(-1, C, H, W): flat layout is (C, H, W) row-major.
    return y.reshape(b, out_channels, out_size, out_size)


def _ref_forward(x, params, class_nr=0, out_size=28, out_channels=1):
    w, b = params["fc_in"][class_nr]
    h = jnp.maximum(x @ w + b, 0.0)
    w, b = params["fc2"]
    h = jnp.maximum(h @ w + b, 0.0)
    w, b = params["fc1"]
    y = 1.0 / (1.0 + jnp.exp(-(h @ w + b)))
    return y.reshape(x.shape[0], out_channels, out_size, out_size)


if __name__ == "__main__":
    OUT_SIZE, OUT_CH, FC, LAT, CLASSES = 28, 1, 400, 10, 1
    key = jax.random.PRNGKey(0)
    k_param, k_input = jax.random.split(key)

    params = init_params(k_param, OUT_SIZE, OUT_CH, FC, LAT, CLASSES)
    kparams = prepare_params(params)
    x = jax.random.normal(k_input, (2, LAT), jnp.float32)

    fwd = jax.jit(functools.partial(decoder_mlp_forward,
                                    out_size=OUT_SIZE, out_channels=OUT_CH))
    out = fwd(x, kparams)
    jax.block_until_ready(out)

    assert out.shape == (2, OUT_CH, OUT_SIZE, OUT_SIZE)
    ref = _ref_forward(x, params, 0, OUT_SIZE, OUT_CH)
    err = float(jnp.max(jnp.abs(out - ref)))
    # bf16 weights/activations feeding the MXU + approx reciprocal -> loosened
    # tolerance vs the f32 reference (errors are tiny after the sigmoid).
    assert jnp.allclose(out, ref, atol=2e-2, rtol=2e-2), f"max abs err {err}"
    print("KERNEL_OK")
</pallas_src>

<mosaic_0001>
module attributes {stable_mosaic.version = 11 : i64} {
  func.func @_mlp_kernel(%arg0: i32, %arg1: memref<8x10xbf16, #tpu.memory_space<vmem>>, %arg2: memref<10x400xbf16, #tpu.memory_space<vmem>>, %arg3: memref<1x400xf32, #tpu.memory_space<vmem>>, %arg4: memref<400x400xbf16, #tpu.memory_space<vmem>>, %arg5: memref<1x400xf32, #tpu.memory_space<vmem>>, %arg6: memref<400x784xbf16, #tpu.memory_space<vmem>>, %arg7: memref<1x784xf32, #tpu.memory_space<vmem>>, %arg8: memref<8x784xf32, #tpu.memory_space<vmem>>) attributes {dimension_semantics = [#tpu.dimension_semantics<parallel>], iteration_bounds = array<i64: 1>, scalar_prefetch = 0 : i64, scratch_operands = 0 : i64, tpu.core_type = #tpu.core_type<tc>, window_params = [{transform_indices = @transform_0, window_bounds = array<i64: 8, 10>}, {pipeline_mode = #tpu.pipeline_mode<synchronous>, transform_indices = @transform_1, window_bounds = array<i64: 10, 400>}, {pipeline_mode = #tpu.pipeline_mode<synchronous>, transform_indices = @transform_2, window_bounds = array<i64: 1, 400>}, {pipeline_mode = #tpu.pipeline_mode<synchronous>, transform_indices = @transform_3, window_bounds = array<i64: 400, 400>}, {pipeline_mode = #tpu.pipeline_mode<synchronous>, transform_indices = @transform_4, window_bounds = array<i64: 1, 400>}, {pipeline_mode = #tpu.pipeline_mode<synchronous>, transform_indices = @transform_5, window_bounds = array<i64: 400, 784>}, {pipeline_mode = #tpu.pipeline_mode<synchronous>, transform_indices = @transform_6, window_bounds = array<i64: 1, 784>}, {transform_indices = @transform_7, window_bounds = array<i64: 8, 784>}]} {
    %c0 = arith.constant 0 : index
    %c0_0 = arith.constant 0 : index
    %0 = vector.load %arg1[%c0, %c0_0] : memref<8x10xbf16, #tpu.memory_space<vmem>>, vector<8x10xbf16>
    %c0_1 = arith.constant 0 : index
    %c0_2 = arith.constant 0 : index
    %1 = vector.load %arg2[%c0_1, %c0_2] : memref<10x400xbf16, #tpu.memory_space<vmem>>, vector<10x400xbf16>
    %cst = arith.constant dense<0.000000e+00> : vector<8x400xf32>
    %2 = tpu.matmul %0, %1, %cst {dimension_numbers = #tpu.dot_dimension_numbers<[1], [0], [0], [1], [0, 0, 1, 1], [], []>} : vector<8x10xbf16>, vector<10x400xbf16>, vector<8x400xf32> -> vector<8x400xf32>
    %c0_3 = arith.constant 0 : index
    %c0_4 = arith.constant 0 : index
    %3 = vector.load %arg3[%c0_3, %c0_4] : memref<1x400xf32, #tpu.memory_space<vmem>>, vector<1x400xf32>
    %4 = vector.broadcast %3 : vector<1x400xf32> to vector<8x400xf32>
    %5 = arith.addf %2, %4 : vector<8x400xf32>
    %cst_5 = arith.constant 0.000000e+00 : f32
    %6 = vector.broadcast %cst_5 : f32 to vector<8x400xf32>
    %7 = arith.maximumf %5, %6 : vector<8x400xf32>
    %8 = arith.truncf %7 : vector<8x400xf32> to vector<8x400xbf16>
    %c0_6 = arith.constant 0 : index
    %c0_7 = arith.constant 0 : index
    %9 = vector.load %arg4[%c0_6, %c0_7] : memref<400x400xbf16, #tpu.memory_space<vmem>>, vector<400x400xbf16>
    %cst_8 = arith.constant dense<0.000000e+00> : vector<8x400xf32>
    %10 = tpu.matmul %8, %9, %cst_8 {dimension_numbers = #tpu.dot_dimension_numbers<[1], [0], [0], [1], [0, 0, 1, 1], [], []>} : vector<8x400xbf16>, vector<400x400xbf16>, vector<8x400xf32> -> vector<8x400xf32>
    %c0_9 = arith.constant 0 : index
    %c0_10 = arith.constant 0 : index
    %11 = vector.load %arg5[%c0_9, %c0_10] : memref<1x400xf32, #tpu.memory_space<vmem>>, vector<1x400xf32>
    %12 = vector.broadcast %11 : vector<1x400xf32> to vector<8x400xf32>
    %13 = arith.addf %10, %12 : vector<8x400xf32>
    %cst_11 = arith.constant 0.000000e+00 : f32
    %14 = vector.broadcast %cst_11 : f32 to vector<8x400xf32>
    %15 = arith.maximumf %13, %14 : vector<8x400xf32>
    %16 = arith.truncf %15 : vector<8x400xf32> to vector<8x400xbf16>
    %c0_12 = arith.constant 0 : index
    %c0_13 = arith.constant 0 : index
    %17 = vector.load %arg6[%c0_12, %c0_13] : memref<400x784xbf16, #tpu.memory_space<vmem>>, vector<400x784xbf16>
    %cst_14 = arith.constant dense<0.000000e+00> : vector<8x784xf32>
    %18 = tpu.matmul %16, %17, %cst_14 {dimension_numbers = #tpu.dot_dimension_numbers<[1], [0], [0], [1], [0, 0, 1, 1], [], []>} : vector<8x400xbf16>, vector<400x784xbf16>, vector<8x784xf32> -> vector<8x784xf32>
    %c0_15 = arith.constant 0 : index
    %c0_16 = arith.constant 0 : index
    %19 = vector.load %arg7[%c0_15, %c0_16] : memref<1x784xf32, #tpu.memory_space<vmem>>, vector<1x784xf32>
    %20 = vector.broadcast %19 : vector<1x784xf32> to vector<8x784xf32>
    %21 = arith.addf %18, %20 : vector<8x784xf32>
    %cst_17 = arith.constant 0.000000e+00 : f32
    %22 = vector.broadcast %cst_17 : f32 to vector<8x784xf32>
    %23 = arith.subf %22, %21 : vector<8x784xf32>
    %24 = math.exp %23 : vector<8x784xf32>
    %cst_18 = arith.constant 1.000000e+00 : f32
    %25 = vector.broadcast %cst_18 : f32 to vector<8x784xf32>
    %26 = arith.addf %25, %24 : vector<8x784xf32>
    %27 = tpu.reciprocal %26 {approx = true} : vector<8x784xf32> -> vector<8x784xf32>
    %c0_19 = arith.constant 0 : index
    %c0_20 = arith.constant 0 : index
    %28 = vector.load %arg8[%c0_19, %c0_20] : memref<8x784xf32, #tpu.memory_space<vmem>>, vector<8x784xf32>
    tpu.vector_store %arg8[%c0_19, %c0_20], %27 {strides = array<i32>} : memref<8x784xf32, #tpu.memory_space<vmem>>, vector<8x784xf32>,
    return
  }
  func.func @transform_0(%arg0: i32) -> (i32, i32) {
    %c0_i32 = arith.constant 0 : i32
    %c0_i32_0 = arith.constant 0 : i32
    return %arg0, %c0_i32 : i32, i32
  }
  func.func @transform_1(%arg0: i32) -> (i32, i32) {
    %c0_i32 = arith.constant 0 : i32
    %c0_i32_0 = arith.constant 0 : i32
    %c0_i32_1 = arith.constant 0 : i32
    return %c0_i32, %c0_i32_0 : i32, i32
  }
  func.func @transform_2(%arg0: i32) -> (i32, i32) {
    %c0_i32 = arith.constant 0 : i32
    %c0_i32_0 = arith.constant 0 : i32
    %c0_i32_1 = arith.constant 0 : i32
    return %c0_i32, %c0_i32_0 : i32, i32
  }
  func.func @transform_3(%arg0: i32) -> (i32, i32) {
    %c0_i32 = arith.constant 0 : i32
    %c0_i32_0 = arith.constant 0 : i32
    %c0_i32_1 = arith.constant 0 : i32
    return %c0_i32, %c0_i32_0 : i32, i32
  }
  func.func @transform_4(%arg0: i32) -> (i32, i32) {
    %c0_i32 = arith.constant 0 : i32
    %c0_i32_0 = arith.constant 0 : i32
    %c0_i32_1 = arith.constant 0 : i32
    return %c0_i32, %c0_i32_0 : i32, i32
  }
  func.func @transform_5(%arg0: i32) -> (i32, i32) {
    %c0_i32 = arith.constant 0 : i32
    %c0_i32_0 = arith.constant 0 : i32
    %c0_i32_1 = arith.constant 0 : i32
    return %c0_i32, %c0_i32_0 : i32, i32
  }
  func.func @transform_6(%arg0: i32) -> (i32, i32) {
    %c0_i32 = arith.constant 0 : i32
    %c0_i32_0 = arith.constant 0 : i32
    %c0_i32_1 = arith.constant 0 : i32
    return %c0_i32, %c0_i32_0 : i32, i32
  }
  func.func @transform_7(%arg0: i32) -> (i32, i32) {
    %c0_i32 = arith.constant 0 : i32
    %c0_i32_0 = arith.constant 0 : i32
    return %arg0, %c0_i32 : i32, i32
  }
}

</mosaic_0001>

<llo_original>
// kernel: decoder_mlp_forward.1
$region0: #{decoder_mlp_forward.1}
  #allocation0 [shape = 'u32[]', space=smem, size = 0x4, offset = 0x4, fixed_abs, tag = 'smem constant byte address 0x4 - core index']
  #allocation1 [shape = 'u32[144,128]{1,0:T(1,128)}', space=vmem, size = 0x12000, scoped, tag = 'internal scratch']
  %s0 = inlined_call_operand.vmem [shape: bf16[8,10], index: 0, kind: input, shape index: {}]
  %s1 = inlined_call_operand.hbm [shape: bf16[10,400], index: 1, kind: input, shape index: {}]
  %s2 = inlined_call_operand.vmem [shape: f32[1,400], index: 2, kind: input, shape index: {}]
  %s3 = inlined_call_operand.hbm [shape: bf16[400,400], index: 3, kind: input, shape index: {}]
  %s4 = inlined_call_operand.vmem [shape: f32[1,400], index: 4, kind: input, shape index: {}]
  %s5 = inlined_call_operand.hbm [shape: bf16[400,784], index: 5, kind: input, shape index: {}]
  %s6 = inlined_call_operand.vmem [shape: f32[1,784], index: 6, kind: input, shape index: {}]
  %s7 = inlined_call_operand.vmem [shape: f32[8,784], index: 7, kind: output, shape index: {}]
  %s8 = sld [smem:[#allocation0]]
  $region50: #{decoder_mlp_forward.1} parent=0
    _
  %s10 = ssub.s32 1, %s8
  %s11 = scalar_select 0, %s10, %s8
  $region1: #{decoder_mlp_forward.1} parent=0
    #allocation2 [shape = 'u8[16384]{0}', space=vmem, size = 0x4000, scoped, tag = 'input window, operand 1, single buffered']
    #allocation3 [shape = 's32[1]{0}', space=sflag, size = 0x4, scoped, tag = 'scoped memory for decoder_mlp_forward.1']
    #allocation4 [shape = 'u8[409600]{0}', space=vmem, size = 0x64000, scoped, tag = 'input window, operand 3, single buffered']
    #allocation5 [shape = 's32[1]{0}', space=sflag, size = 0x4, scoped, tag = 'scoped memory for decoder_mlp_forward.1']
    #allocation6 [shape = 'u8[716800]{0}', space=vmem, size = 0xaf000, scoped, tag = 'input window, operand 5, single buffered']
    %12 = vsyncpa [#allocation3], 0
    %13 = vsyncpa [#allocation5], 0
    // Predicated region
    $region2: #{decoder_mlp_forward.1} parent=1 // pred_check
      _
    $region3: #{decoder_mlp_forward.1} parent=1 // pred_check_branch
      %15 = sbr.rel (0) target = $region5
    $region4: #{decoder_mlp_forward.1} parent=1 // pred_region
      _
    $region5: #{decoder_mlp_forward.1} parent=1 // pred_fallthru
      _
    // Predicated region
    $region6: #{decoder_mlp_forward.1} parent=1 // pred_check
      _
    $region7: #{decoder_mlp_forward.1} parent=1 // pred_check_branch
      %17 = sbr.rel (0) target = $region9
    $region8: #{decoder_mlp_forward.1} parent=1 // pred_region
      %s19 = ssub.s32 512, 512
      %20 = vsyncadd [#allocation3], %s19
      %s21 = sshll.u32 [#allocation2], 4
      %s22 = int_to_ptr.vmem [resolvable:$true] %s21
      %27 = dma.hbm_to_vmem [thread:$0]  %s1, 512, %s22, [#allocation3], 256, 256, 16
    $region9: #{decoder_mlp_forward.1} parent=1 // pred_fallthru
      _
    // Predicated region
    $region10: #{decoder_mlp_forward.1} parent=1 // pred_check
      _
    $region11: #{decoder_mlp_forward.1} parent=1 // pred_check_branch
      %29 = sbr.rel (0) target = $region13
    $region12: #{decoder_mlp_forward.1} parent=1 // pred_region
      _
    $region13: #{decoder_mlp_forward.1} parent=1 // pred_fallthru
      _
    // Predicated region
    $region14: #{decoder_mlp_forward.1} parent=1 // pred_check
      _
    $region15: #{decoder_mlp_forward.1} parent=1 // pred_check_branch
      %31 = sbr.rel (0) target = $region17
    $region16: #{decoder_mlp_forward.1} parent=1 // pred_region
      %s33 = ssub.s32 12800, 12800
      %34 = vsyncadd [#allocation5], %s33
      %s35 = sshll.u32 [#allocation4], 4
      %s36 = int_to_ptr.vmem [resolvable:$true] %s35
      %41 = dma.hbm_to_vmem [thread:$0]  %s3, 12800, %s36, [#allocation5], 256, 256, 16
    $region17: #{decoder_mlp_forward.1} parent=1 // pred_fallthru
      _
    // Predicated region
    $region18: #{decoder_mlp_forward.1} parent=1 // pred_check
      _
    $region19: #{decoder_mlp_forward.1} parent=1 // pred_check_branch
      %43 = sbr.rel (0) target = $region21
    $region20: #{decoder_mlp_forward.1} parent=1 // pred_region
      _
    $region21: #{decoder_mlp_forward.1} parent=1 // pred_fallthru
      _
    // Predicated region
    $region22: #{decoder_mlp_forward.1} parent=1 // pred_check
      _
    $region23: #{decoder_mlp_forward.1} parent=1 // pred_check_branch
      %45 = sbr.rel (0) target = $region25
    $region24: #{decoder_mlp_forward.1} parent=1 // pred_region
      %s47 = ssub.s32 22400, 22400
      %48 = vsyncadd [#allocation5], %s47
      %s49 = sshll.u32 [#allocation6], 4
      %s50 = int_to_ptr.vmem [resolvable:$true] %s49
      %55 = dma.hbm_to_vmem [thread:$0]  %s5, 22400, %s50, [#allocation5], 448, 448, 28
    $region25: #{decoder_mlp_forward.1} parent=1 // pred_fallthru
      _
    // Predicated region
    $region26: #{decoder_mlp_forward.1} parent=1 // pred_check
      _
    $region27: #{decoder_mlp_forward.1} parent=1 // pred_check_branch
      %57 = sbr.rel (0) target = $region29
    $region28: #{decoder_mlp_forward.1} parent=1 // pred_region
      _
    $region29: #{decoder_mlp_forward.1} parent=1 // pred_fallthru
      _
    // Predicated region
    $region30: #{decoder_mlp_forward.1} parent=1 // pred_check
      _
    $region31: #{decoder_mlp_forward.1} parent=1 // pred_check_branch
      %59 = sbr.rel (0) target = $region33
    $region32: #{decoder_mlp_forward.1} parent=1 // pred_region
      %60 = dma.done [#allocation3], 512
    $region33: #{decoder_mlp_forward.1} parent=1 // pred_fallthru
      _
    // Predicated region
    $region34: #{decoder_mlp_forward.1} parent=1 // pred_check
      _
    $region35: #{decoder_mlp_forward.1} parent=1 // pred_check_branch
      %62 = sbr.rel (0) target = $region37
    $region36: #{decoder_mlp_forward.1} parent=1 // pred_region
      %63 = dma.done [#allocation5], 12800
    $region37: #{decoder_mlp_forward.1} parent=1 // pred_fallthru
      _
    // Predicated region
    $region38: #{decoder_mlp_forward.1} parent=1 // pred_check
      _
    $region39: #{decoder_mlp_forward.1} parent=1 // pred_check_branch
      %65 = sbr.rel (0) target = $region41
    $region40: #{decoder_mlp_forward.1} parent=1 // pred_region
      %66 = dma.done [#allocation5], 22400
    $region41: #{decoder_mlp_forward.1} parent=1 // pred_fallthru
      _
    %v68 = vld [vmem:[%s0] sm:$0xf]
    %v69 = vld [vmem:[#allocation2] sm:$0xff]
    %v70 = vld [vmem:[#allocation2 + $0x8] sm:$0xff]
    %v71 = vld [vmem:[#allocation2 + $0x10] sm:$0x11]
    %v72 = vld [vmem:[#allocation2 + $0x18] sm:$0x11]
    %v73 = vld [vmem:[%s2] sm:$0xf]
    %v75 = vlaneseq
    %v76 = vshrl.u32 %v75, 7
    %v77 = vsub.s32 0, %v76
    %v78 = vrot.slane %v73, %v77
    %v79 = vlaneseq
    %v80 = vshrl.u32 %v79, 7
    %v81 = vsub.s32 1, %v80
    %v82 = vrot.slane %v73, %v81
    %v83 = vlaneseq
    %v84 = vshrl.u32 %v83, 7
    %v85 = vsub.s32 2, %v84
    %v86 = vrot.slane %v73, %v85
    %v87 = vlaneseq
    %v88 = vshrl.u32 %v87, 7
    %v89 = vsub.s32 3, %v88
    %v90 = vrot.slane %v73, %v89
    %v99 = vunpack.c.l.b16 %v69
    %v100 = vunpack.c.h.b16 %v69
    %v101 = vunpack.c.l.b16 %v70
    %v102 = vunpack.c.h.b16 %v70
    %v103 = vunpack.c.l.b16 %v71
    %v104 = vunpack.c.h.b16 %v71
    %v105 = vunpack.c.l.b16 %v72
    %v106 = vunpack.c.h.b16 %v72
    %v107 = vpack.c.b16 %v103, %v99
    %v108 = vpack.c.b16 %v104, %v100
    %v109 = vpack.c.b16 %v105, %v101
    %v110 = vpack.c.b16 %v106, %v102
    %vm111 = vcmask 80896
    %v113 = vsel %vm111, %v68, 0
    %vm115 = vcmask 1044480
    %v117 = vsel %vm115, %v107, 0
    %v120 = vsel %vm115, %v108, 0
    %v123 = vsel %vm115, %v109, 0
    %v126 = vsel %vm115, %v110, 0
    %128 = vmatprep.subr.bf16.mxu0 0
    %129 = vmatpush1.bf16.msra.mxu0 0
    %130 = vmatprep.subr.bf16.mxu0 0
    %131 = vmatpush1.bf16.msra.mxu0 0
    %132 = vmatprep.subr.bf16.mxu0 0
    %133 = vmatpush1.bf16.msra.mxu0 0
    %134 = vmatprep.subr.bf16.mxu0 0
    %135 = vmatpush1.bf16.msra.mxu0 0
    %136 = vmatprep.subr.bf16.mxu0 0
    %137 = vmatpush1.bf16.msra.mxu0 0
    %138 = vmatprep.subr.bf16.mxu0 0
    %139 = vmatpush1.bf16.msra.mxu0 0
    %140 = vmatprep.subr.bf16.mxu0 0
    %141 = vmatpush1.bf16.msra.mxu0 0
    %142 = vmatprep.subr.bf16.mxu0 %v120
    %143 = vmatpush1.bf16.msra.mxu0 %v117
    %144 = vmatprep.subr.bf16.mxu0 0
    %145 = vmatpush2.bf16.msra.mxu0 0
    %146 = vmatprep.subr.bf16.mxu0 0
    %147 = vmatpush2.bf16.msra.mxu0 0
    %148 = vmatprep.subr.bf16.mxu0 0
    %149 = vmatpush2.bf16.msra.mxu0 0
    %150 = vmatprep.subr.bf16.mxu0 0
    %151 = vmatpush2.bf16.msra.mxu0 0
    %152 = vmatprep.subr.bf16.mxu0 0
    %153 = vmatpush2.bf16.msra.mxu0 0
    %154 = vmatprep.subr.bf16.mxu0 0
    %155 = vmatpush2.bf16.msra.mxu0 0
    %156 = vmatprep.subr.bf16.mxu0 0
    %157 = vmatpush2.bf16.msra.mxu0 0
    %158 = vmatprep.subr.bf16.mxu0 0
    %159 = vmatpush2.bf16.msra.mxu0 0
    %160 = vmatprep.mubr.bf16.mxu0 0
    %161 = vmatmul.mubr.bf16.gmra.mxu0 %v113
    %v162 = vpop.f32.mrf.mxu0
    %v163 = vadd.f32 %v78, %v162
    %v164 = vpop.f32.mrf.mxu0
    %v165 = vadd.f32 %v82, %v164
    %v166 = vpop.f32.mrf.mxu0
    %v167 = vpop.f32.mrf.mxu0
    %168 = vdwg.mxu0
    %169 = vmatprep.subr.bf16.mxu0 0
    %170 = vmatpush1.bf16.msra.mxu0 0
    %171 = vmatprep.subr.bf16.mxu0 0
    %172 = vmatpush1.bf16.msra.mxu0 0
    %173 = vmatprep.subr.bf16.mxu0 0
    %174 = vmatpush1.bf16.msra.mxu0 0
    %175 = vmatprep.subr.bf16.mxu0 0
    %176 = vmatpush1.bf16.msra.mxu0 0
    %177 = vmatprep.subr.bf16.mxu0 0
    %178 = vmatpush1.bf16.msra.mxu0 0
    %179 = vmatprep.subr.bf16.mxu0 0
    %180 = vmatpush1.bf16.msra.mxu0 0
    %181 = vmatprep.subr.bf16.mxu0 0
    %182 = vmatpush1.bf16.msra.mxu0 0
    %183 = vmatprep.subr.bf16.mxu0 %v126
    %184 = vmatpush1.bf16.msra.mxu0 %v123
    %185 = vmatprep.subr.bf16.mxu0 0
    %186 = vmatpush2.bf16.msra.mxu0 0
    %187 = vmatprep.subr.bf16.mxu0 0
    %188 = vmatpush2.bf16.msra.mxu0 0
    %189 = vmatprep.subr.bf16.mxu0 0
    %190 = vmatpush2.bf16.msra.mxu0 0
    %191 = vmatprep.subr.bf16.mxu0 0
    %192 = vmatpush2.bf16.msra.mxu0 0
    %193 = vmatprep.subr.bf16.mxu0 0
    %194 = vmatpush2.bf16.msra.mxu0 0
    %195 = vmatprep.subr.bf16.mxu0 0
    %196 = vmatpush2.bf16.msra.mxu0 0
    %197 = vmatprep.subr.bf16.mxu0 0
    %198 = vmatpush2.bf16.msra.mxu0 0
    %199 = vmatprep.subr.bf16.mxu0 0
    %200 = vmatpush2.bf16.msra.mxu0 0
    %201 = vmatprep.mubr.bf16.mxu0 0
    %202 = vmatmul.mubr.bf16.gmra.mxu0 %v113
    %v203 = vpop.f32.mrf.mxu0
    %v204 = vadd.f32 %v86, %v203
    %v205 = vpop.f32.mrf.mxu0
    %v206 = vadd.f32 %v90, %v205
    %v207 = vpop.f32.mrf.mxu0
    %v208 = vpop.f32.mrf.mxu0
    %209 = vdwg.mxu0
    %v210 = vmax.f32 %v163, 0.0
    %v211 = vmax.f32 %v165, 0.0
    %v212 = vmax.f32 %v204, 0.0
    %v213 = vmax.f32 %v206, 0.0
    %v214 = vpack.c.bf16 %v210, %v210
    %v215 = vpack.c.bf16 %v211, %v211
    %v216 = vpack.c.bf16 %v212, %v212
    %v217 = vpack.c.bf16 %v213, %v213
    %v218 = vld [vmem:[#allocation4] sm:$0xff]
    %v219 = vld [vmem:[#allocation4 + $0x8] sm:$0xff]
    %v220 = vld [vmem:[#allocation4 + $0x10] sm:$0xff]
    %v221 = vld [vmem:[#allocation4 + $0x18] sm:$0xff]
    %v222 = vld [vmem:[#allocation4 + $0x20] sm:$0xff]
    %v223 = vld [vmem:[#allocation4 + $0x28] sm:$0xff]
    %v224 = vld [vmem:[#allocation4 + $0x30] sm:$0xff]
    %v225 = vld [vmem:[#allocation4 + $0x38] sm:$0xff]
    %v226 = vld [vmem:[#allocation4 + $0x40] sm:$0xff]
    %v227 = vld [vmem:[#allocation4 + $0x48] sm:$0xff]
    %v228 = vld [vmem:[#allocation4 + $0x50] sm:$0xff]
    %v229 = vld [vmem:[#allocation4 + $0x58] sm:$0xff]
    %v230 = vld [vmem:[#allocation4 + $0x60] sm:$0xff]
    %v231 = vld [vmem:[#allocation4 + $0x68] sm:$0xff]
    %v232 = vld [vmem:[#allocation4 + $0x70] sm:$0xff]
    %v233 = vld [vmem:[#allocation4 + $0x78] sm:$0xff]
    %v234 = vld [vmem:[#allocation4 + $0x80] sm:$0xff]
    %v235 = vld [vmem:[#allocation4 + $0x88] sm:$0xff]
    %v236 = vld [vmem:[#allocation4 + $0x90] sm:$0xff]
    %v237 = vld [vmem:[#allocation4 + $0x98] sm:$0xff]
    %v238 = vld [vmem:[#allocation4 + $0xa0] sm:$0xff]
    %v239 = vld [vmem:[#allocation4 + $0xa8] sm:$0xff]
    %v240 = vld [vmem:[#allocation4 + $0xb0] sm:$0xff]
    %v241 = vld [vmem:[#allocation4 + $0xb8] sm:$0xff]
    %v242 = vld [vmem:[#allocation4 + $0xc0] sm:$0xff]
    %v243 = vld [vmem:[#allocation4 + $0xc8] sm:$0xff]
    %v244 = vld [vmem:[#allocation4 + $0xd0] sm:$0xff]
    %v245 = vld [vmem:[#allocation4 + $0xd8] sm:$0xff]
    %v246 = vld [vmem:[#allocation4 + $0xe0] sm:$0xff]
    %v247 = vld [vmem:[#allocation4 + $0xe8] sm:$0xff]
    %v248 = vld [vmem:[#allocation4 + $0xf0] sm:$0xff]
    %v249 = vld [vmem:[#allocation4 + $0xf8] sm:$0xff]
    %v250 = vld [vmem:[#allocation4 + $0x100] sm:$0xff]
    %v251 = vld [vmem:[#allocation4 + $0x108] sm:$0xff]
    %v252 = vld [vmem:[#allocation4 + $0x110] sm:$0xff]
    %v253 = vld [vmem:[#allocation4 + $0x118] sm:$0xff]
    %v254 = vld [vmem:[#allocation4 + $0x120] sm:$0xff]
    %v255 = vld [vmem:[#allocation4 + $0x128] sm:$0xff]
    %v256 = vld [vmem:[#allocation4 + $0x130] sm:$0xff]
    %v257 = vld [vmem:[#allocation4 + $0x138] sm:$0xff]
    %v258 = vld [vmem:[#allocation4 + $0x140] sm:$0xff]
    %v259 = vld [vmem:[#allocation4 + $0x148] sm:$0xff]
    %v260 = vld [vmem:[#allocation4 + $0x150] sm:$0xff]
    %v261 = vld [vmem:[#allocation4 + $0x158] sm:$0xff]
    %v262 = vld [vmem:[#allocation4 + $0x160] sm:$0xff]
    %v263 = vld [vmem:[#allocation4 + $0x168] sm:$0xff]
    %v264 = vld [vmem:[#allocation4 + $0x170] sm:$0xff]
    %v265 = vld [vmem:[#allocation4 + $0x178] sm:$0xff]
    %v266 = vld [vmem:[#allocation4 + $0x180] sm:$0xff]
    %v267 = vld [vmem:[#allocation4 + $0x188] sm:$0xff]
    %v268 = vld [vmem:[#allocation4 + $0x190] sm:$0xff]
    %v269 = vld [vmem:[#allocation4 + $0x198] sm:$0xff]
    %v270 = vld [vmem:[#allocation4 + $0x1a0] sm:$0xff]
    %v271 = vld [vmem:[#allocation4 + $0x1a8] sm:$0xff]
    %v272 = vld [vmem:[#allocation4 + $0x1b0] sm:$0xff]
    %v273 = vld [vmem:[#allocation4 + $0x1b8] sm:$0xff]
    %v274 = vld [vmem:[#allocation4 + $0x1c0] sm:$0xff]
    %v275 = vld [vmem:[#allocation4 + $0x1c8] sm:$0xff]
    %v276 = vld [vmem:[#allocation4 + $0x1d0] sm:$0xff]
    %v277 = vld [vmem:[#allocation4 + $0x1d8] sm:$0xff]
    %v278 = vld [vmem:[#allocation4 + $0x1e0] sm:$0xff]
    %v279 = vld [vmem:[#allocation4 + $0x1e8] sm:$0xff]
    %v280 = vld [vmem:[#allocation4 + $0x1f0] sm:$0xff]
    %v281 = vld [vmem:[#allocation4 + $0x1f8] sm:$0xff]
    %v282 = vld [vmem:[#allocation4 + $0x200] sm:$0xff]
    %v283 = vld [vmem:[#allocation4 + $0x208] sm:$0xff]
    %v284 = vld [vmem:[#allocation4 + $0x210] sm:$0xff]
    %v285 = vld [vmem:[#allocation4 + $0x218] sm:$0xff]
    %v286 = vld [vmem:[#allocation4 + $0x220] sm:$0xff]
    %v287 = vld [vmem:[#allocation4 + $0x228] sm:$0xff]
    %v288 = vld [vmem:[#allocation4 + $0x230] sm:$0xff]
    %v289 = vld [vmem:[#allocation4 + $0x238] sm:$0xff]
    %v290 = vld [vmem:[#allocation4 + $0x240] sm:$0xff]
    %v291 = vld [vmem:[#allocation4 + $0x248] sm:$0xff]
    %v292 = vld [vmem:[#allocation4 + $0x250] sm:$0xff]
    %v293 = vld [vmem:[#allocation4 + $0x258] sm:$0xff]
    %v294 = vld [vmem:[#allocation4 + $0x260] sm:$0xff]
    %v295 = vld [vmem:[#allocation4 + $0x268] sm:$0xff]
    %v296 = vld [vmem:[#allocation4 + $0x270] sm:$0xff]
    %v297 = vld [vmem:[#allocation4 + $0x278] sm:$0xff]
    %v298 = vld [vmem:[#allocation4 + $0x280] sm:$0xff]
    %v299 = vld [vmem:[#allocation4 + $0x288] sm:$0xff]
    %v300 = vld [vmem:[#allocation4 + $0x290] sm:$0xff]
    %v301 = vld [vmem:[#allocation4 + $0x298] sm:$0xff]
    %v302 = vld [vmem:[#allocation4 + $0x2a0] sm:$0xff]
    %v303 = vld [vmem:[#allocation4 + $0x2a8] sm:$0xff]
    %v304 = vld [vmem:[#allocation4 + $0x2b0] sm:$0xff]
    %v305 = vld [vmem:[#allocation4 + $0x2b8] sm:$0xff]
    %v306 = vld [vmem:[#allocation4 + $0x2c0] sm:$0xff]
    %v307 = vld [vmem:[#allocation4 + $0x2c8] sm:$0xff]
    %v308 = vld [vmem:[#allocation4 + $0x2d0] sm:$0xff]
    %v309 = vld [vmem:[#allocation4 + $0x2d8] sm:$0xff]
    %v310 = vld [vmem:[#allocation4 + $0x2e0] sm:$0xff]
    %v311 = vld [vmem:[#allocation4 + $0x2e8] sm:$0xff]
    %v312 = vld [vmem:[#allocation4 + $0x2f0] sm:$0xff]
    %v313 = vld [vmem:[#allocation4 + $0x2f8] sm:$0xff]
    %v314 = vld [vmem:[#allocation4 + $0x300] sm:$0xff]
    %v315 = vld [vmem:[#allocation4 + $0x308] sm:$0xff]
    %v316 = vld [vmem:[#allocation4 + $0x310] sm:$0xff]
    %v317 = vld [vmem:[#allocation4 + $0x318] sm:$0xff]
    %v318 = vld [vmem:[%s4] sm:$0xf]
    %v320 = vlaneseq
    %v321 = vshrl.u32 %v320, 7
    %v322 = vsub.s32 0, %v321
    %v323 = vrot.slane %v318, %v322
    %v324 = vlaneseq
    %v325 = vshrl.u32 %v324, 7
    %v326 = vsub.s32 1, %v325
    %v327 = vrot.slane %v318, %v326
    %v328 = vlaneseq
    %v329 = vshrl.u32 %v328, 7
    %v330 = vsub.s32 2, %v329
    %v331 = vrot.slane %v318, %v330
    %v332 = vlaneseq
    %v333 = vshrl.u32 %v332, 7
    %v334 = vsub.s32 3, %v333
    %v335 = vrot.slane %v318, %v334
    %v440 = vunpack.c.l.b16 %v218
    %v441 = vunpack.c.h.b16 %v218
    %v442 = vunpack.c.l.b16 %v219
    %v443 = vunpack.c.h.b16 %v219
    %v444 = vunpack.c.l.b16 %v220
    %v445 = vunpack.c.h.b16 %v220
    %v446 = vunpack.c.l.b16 %v221
    %v447 = vunpack.c.h.b16 %v221
    %v448 = vunpack.c.l.b16 %v222
    %v449 = vunpack.c.h.b16 %v222
    %v450 = vunpack.c.l.b16 %v223
    %v451 = vunpack.c.h.b16 %v223
    %v452 = vunpack.c.l.b16 %v224
    %v453 = vunpack.c.h.b16 %v224
    %v454 = vunpack.c.l.b16 %v225
    %v455 = vunpack.c.h.b16 %v225
    %v456 = vunpack.c.l.b16 %v226
    %v457 = vunpack.c.h.b16 %v226
    %v458 = vunpack.c.l.b16 %v227
    %v459 = vunpack.c.h.b16 %v227
    %v460 = vunpack.c.l.b16 %v228
    %v461 = vunpack.c.h.b16 %v228
    %v462 = vunpack.c.l.b16 %v229
    %v463 = vunpack.c.h.b16 %v229
    %v464 = vunpack.c.l.b16 %v230
    %v465 = vunpack.c.h.b16 %v230
    %v466 = vunpack.c.l.b16 %v231
    %v467 = vunpack.c.h.b16 %v231
    %v468 = vunpack.c.l.b16 %v232
    %v469 = vunpack.c.h.b16 %v232
    %v470 = vunpack.c.l.b16 %v233
    %v471 = vunpack.c.h.b16 %v233
    %v472 = vunpack.c.l.b16 %v234
    %v473 = vunpack.c.h.b16 %v234
    %v474 = vunpack.c.l.b16 %v235
    %v475 = vunpack.c.h.b16 %v235
    %v476 = vunpack.c.l.b16 %v236
    %v477 = vunpack.c.h.b16 %v236
    %v478 = vunpack.c.l.b16 %v237
    %v479 = vunpack.c.h.b16 %v237
    %v480 = vunpack.c.l.b16 %v238
    %v481 = vunpack.c.h.b16 %v238
    %v482 = vunpack.c.l.b16 %v239
    %v483 = vunpack.c.h.b16 %v239
    %v484 = vunpack.c.l.b16 %v240
    %v485 = vunpack.c.h.b16 %v240
    %v486 = vunpack.c.l.b16 %v241
    %v487 = vunpack.c.h.b16 %v241
    %v488 = vunpack.c.l.b16 %v242
    %v489 = vunpack.c.h.b16 %v242
    %v490 = vunpack.c.l.b16 %v243
    %v491 = vunpack.c.h.b16 %v243
    %v492 = vunpack.c.l.b16 %v244
    %v493 = vunpack.c.h.b16 %v244
    %v494 = vunpack.c.l.b16 %v245
    %v495 = vunpack.c.h.b16 %v245
    %v496 = vunpack.c.l.b16 %v246
    %v497 = vunpack.c.h.b16 %v246
    %v498 = vunpack.c.l.b16 %v247
    %v499 = vunpack.c.h.b16 %v247
    %v500 = vunpack.c.l.b16 %v248
    %v501 = vunpack.c.h.b16 %v248
    %v502 = vunpack.c.l.b16 %v249
    %v503 = vunpack.c.h.b16 %v249
    %v504 = vunpack.c.l.b16 %v250
    %v505 = vunpack.c.h.b16 %v250
    %v506 = vunpack.c.l.b16 %v251
    %v507 = vunpack.c.h.b16 %v251
    %v508 = vunpack.c.l.b16 %v252
    %v509 = vunpack.c.h.b16 %v252
    %v510 = vunpack.c.l.b16 %v253
    %v511 = vunpack.c.h.b16 %v253
    %v512 = vunpack.c.l.b16 %v254
    %v513 = vunpack.c.h.b16 %v254
    %v514 = vunpack.c.l.b16 %v255
    %v515 = vunpack.c.h.b16 %v255
    %v516 = vunpack.c.l.b16 %v256
    %v517 = vunpack.c.h.b16 %v256
    %v518 = vunpack.c.l.b16 %v257
    %v519 = vunpack.c.h.b16 %v257
    %v520 = vunpack.c.l.b16 %v258
    %v521 = vunpack.c.h.b16 %v258
    %v522 = vunpack.c.l.b16 %v259
    %v523 = vunpack.c.h.b16 %v259
    %v524 = vunpack.c.l.b16 %v260
    %v525 = vunpack.c.h.b16 %v260
    %v526 = vunpack.c.l.b16 %v261
    %v527 = vunpack.c.h.b16 %v261
    %v528 = vunpack.c.l.b16 %v262
    %v529 = vunpack.c.h.b16 %v262
    %v530 = vunpack.c.l.b16 %v263
    %v531 = vunpack.c.h.b16 %v263
    %v532 = vunpack.c.l.b16 %v264
    %v533 = vunpack.c.h.b16 %v264
    %v534 = vunpack.c.l.b16 %v265
    %v535 = vunpack.c.h.b16 %v265
    %v536 = vunpack.c.l.b16 %v266
    %v537 = vunpack.c.h.b16 %v266
    %v538 = vunpack.c.l.b16 %v267
    %v539 = vunpack.c.h.b16 %v267
    %v540 = vunpack.c.l.b16 %v268
    %v541 = vunpack.c.h.b16 %v268
    %v542 = vunpack.c.l.b16 %v269
    %v543 = vunpack.c.h.b16 %v269
    %v544 = vunpack.c.l.b16 %v270
    %v545 = vunpack.c.h.b16 %v270
    %v546 = vunpack.c.l.b16 %v271
    %v547 = vunpack.c.h.b16 %v271
    %v548 = vunpack.c.l.b16 %v272
    %v549 = vunpack.c.h.b16 %v272
    %v550 = vunpack.c.l.b16 %v273
    %v551 = vunpack.c.h.b16 %v273
    %v552 = vunpack.c.l.b16 %v274
    %v553 = vunpack.c.h.b16 %v274
    %v554 = vunpack.c.l.b16 %v275
    %v555 = vunpack.c.h.b16 %v275
    %v556 = vunpack.c.l.b16 %v276
    %v557 = vunpack.c.h.b16 %v276
    %v558 = vunpack.c.l.b16 %v277
    %v559 = vunpack.c.h.b16 %v277
    %v560 = vunpack.c.l.b16 %v278
    %v561 = vunpack.c.h.b16 %v278
    %v562 = vunpack.c.l.b16 %v279
    %v563 = vunpack.c.h.b16 %v279
    %v564 = vunpack.c.l.b16 %v280
    %v565 = vunpack.c.h.b16 %v280
    %v566 = vunpack.c.l.b16 %v281
    %v567 = vunpack.c.h.b16 %v281
    %v568 = vunpack.c.l.b16 %v282
    %v569 = vunpack.c.h.b16 %v282
    %v570 = vunpack.c.l.b16 %v283
    %v571 = vunpack.c.h.b16 %v283
    %v572 = vunpack.c.l.b16 %v284
    %v573 = vunpack.c.h.b16 %v284
    %v574 = vunpack.c.l.b16 %v285
    %v575 = vunpack.c.h.b16 %v285
    %v576 = vunpack.c.l.b16 %v286
    %v577 = vunpack.c.h.b16 %v286
    %v578 = vunpack.c.l.b16 %v287
    %v579 = vunpack.c.h.b16 %v287
    %v580 = vunpack.c.l.b16 %v288
    %v581 = vunpack.c.h.b16 %v288
    %v582 = vunpack.c.l.b16 %v289
    %v583 = vunpack.c.h.b16 %v289
    %v584 = vunpack.c.l.b16 %v290
    %v585 = vunpack.c.h.b16 %v290
    %v586 = vunpack.c.l.b16 %v291
    %v587 = vunpack.c.h.b16 %v291
    %v588 = vunpack.c.l.b16 %v292
    %v589 = vunpack.c.h.b16 %v292
    %v590 = vunpack.c.l.b16 %v293
    %v591 = vunpack.c.h.b16 %v293
    %v592 = vunpack.c.l.b16 %v294
    %v593 = vunpack.c.h.b16 %v294
    %v594 = vunpack.c.l.b16 %v295
    %v595 = vunpack.c.h.b16 %v295
    %v596 = vunpack.c.l.b16 %v296
    %v597 = vunpack.c.h.b16 %v296
    %v598 = vunpack.c.l.b16 %v297
    %v599 = vunpack.c.h.b16 %v297
    %v600 = vunpack.c.l.b16 %v298
    %v601 = vunpack.c.h.b16 %v298
    %v602 = vunpack.c.l.b16 %v299
    %v603 = vunpack.c.h.b16 %v299
    %v604 = vunpack.c.l.b16 %v300
    %v605 = vunpack.c.h.b16 %v300
    %v606 = vunpack.c.l.b16 %v301
    %v607 = vunpack.c.h.b16 %v301
    %v608 = vunpack.c.l.b16 %v302
    %v609 = vunpack.c.h.b16 %v302
    %v610 = vunpack.c.l.b16 %v303
    %v611 = vunpack.c.h.b16 %v303
    %v612 = vunpack.c.l.b16 %v304
    %v613 = vunpack.c.h.b16 %v304
    %v614 = vunpack.c.l.b16 %v305
    %v615 = vunpack.c.h.b16 %v305
    %v616 = vunpack.c.l.b16 %v306
    %v617 = vunpack.c.h.b16 %v306
    %v618 = vunpack.c.l.b16 %v307
    %v619 = vunpack.c.h.b16 %v307
    %v620 = vunpack.c.l.b16 %v308
    %v621 = vunpack.c.h.b16 %v308
    %v622 = vunpack.c.l.b16 %v309
    %v623 = vunpack.c.h.b16 %v309
    %v624 = vunpack.c.l.b16 %v310
    %v625 = vunpack.c.h.b16 %v310
    %v626 = vunpack.c.l.b16 %v311
    %v627 = vunpack.c.h.b16 %v311
    %v628 = vunpack.c.l.b16 %v312
    %v629 = vunpack.c.h.b16 %v312
    %v630 = vunpack.c.l.b16 %v313
    %v631 = vunpack.c.h.b16 %v313
    %v632 = vunpack.c.l.b16 %v314
    %v633 = vunpack.c.h.b16 %v314
    %v634 = vunpack.c.l.b16 %v315
    %v635 = vunpack.c.h.b16 %v315
    %v636 = vunpack.c.l.b16 %v316
    %v637 = vunpack.c.h.b16 %v316
    %v638 = vunpack.c.l.b16 %v317
    %v639 = vunpack.c.h.b16 %v317
    %v640 = vpack.c.b16 %v444, %v440
    %v641 = vpack.c.b16 %v445, %v441
    %v642 = vpack.c.b16 %v446, %v442
    %v643 = vpack.c.b16 %v447, %v443
    %v644 = vpack.c.b16 %v452, %v448
    %v645 = vpack.c.b16 %v453, %v449
    %v646 = vpack.c.b16 %v454, %v450
    %v647 = vpack.c.b16 %v455, %v451
    %v648 = vpack.c.b16 %v460, %v456
    %v649 = vpack.c.b16 %v461, %v457
    %v650 = vpack.c.b16 %v462, %v458
    %v651 = vpack.c.b16 %v463, %v459
    %v652 = vpack.c.b16 %v468, %v464
    %v653 = vpack.c.b16 %v469, %v465
    %v654 = vpack.c.b16 %v470, %v466
    %v655 = vpack.c.b16 %v471, %v467
    %v656 = vpack.c.b16 %v476, %v472
    %v657 = vpack.c.b16 %v477, %v473
    %v658 = vpack.c.b16 %v478, %v474
    %v659 = vpack.c.b16 %v479, %v475
    %v660 = vpack.c.b16 %v484, %v480
    %v661 = vpack.c.b16 %v485, %v481
    %v662 = vpack.c.b16 %v486, %v482
    %v663 = vpack.c.b16 %v487, %v483
    %v664 = vpack.c.b16 %v492, %v488
    %v665 = vpack.c.b16 %v493, %v489
    %v666 = vpack.c.b16 %v494, %v490
    %v667 = vpack.c.b16 %v495, %v491
    %v668 = vpack.c.b16 %v500, %v496
    %v669 = vpack.c.b16 %v501, %v497
    %v670 = vpack.c.b16 %v502, %v498
    %v671 = vpack.c.b16 %v503, %v499
    %v672 = vpack.c.b16 %v508, %v504
    %v673 = vpack.c.b16 %v509, %v505
    %v674 = vpack.c.b16 %v510, %v506
    %v675 = vpack.c.b16 %v511, %v507
    %v676 = vpack.c.b16 %v516, %v512
    %v677 = vpack.c.b16 %v517, %v513
    %v678 = vpack.c.b16 %v518, %v514
    %v679 = vpack.c.b16 %v519, %v515
    %v680 = vpack.c.b16 %v524, %v520
    %v681 = vpack.c.b16 %v525, %v521
    %v682 = vpack.c.b16 %v526, %v522
    %v683 = vpack.c.b16 %v527, %v523
    %v684 = vpack.c.b16 %v532, %v528
    %v685 = vpack.c.b16 %v533, %v529
    %v686 = vpack.c.b16 %v534, %v530
    %v687 = vpack.c.b16 %v535, %v531
    %v688 = vpack.c.b16 %v540, %v536
    %v689 = vpack.c.b16 %v541, %v537
    %v690 = vpack.c.b16 %v542, %v538
    %v691 = vpack.c.b16 %v543, %v539
    %v692 = vpack.c.b16 %v548, %v544
    %v693 = vpack.c.b16 %v549, %v545
    %v694 = vpack.c.b16 %v550, %v546
    %v695 = vpack.c.b16 %v551, %v547
    %v696 = vpack.c.b16 %v556, %v552
    %v697 = vpack.c.b16 %v557, %v553
    %v698 = vpack.c.b16 %v558, %v554
    %v699 = vpack.c.b16 %v559, %v555
    %v700 = vpack.c.b16 %v564, %v560
    %v701 = vpack.c.b16 %v565, %v561
    %v702 = vpack.c.b16 %v566, %v562
    %v703 = vpack.c.b16 %v567, %v563
    %v704 = vpack.c.b16 %v572, %v568
    %v705 = vpack.c.b16 %v573, %v569
    %v706 = vpack.c.b16 %v574, %v570
    %v707 = vpack.c.b16 %v575, %v571
    %v708 = vpack.c.b16 %v580, %v576
    %v709 = vpack.c.b16 %v581, %v577
    %v710 = vpack.c.b16 %v582, %v578
    %v711 = vpack.c.b16 %v583, %v579
    %v712 = vpack.c.b16 %v588, %v584
    %v713 = vpack.c.b16 %v589, %v585
    %v714 = vpack.c.b16 %v590, %v586
    %v715 = vpack.c.b16 %v591, %v587
    %v716 = vpack.c.b16 %v596, %v592
    %v717 = vpack.c.b16 %v597, %v593
    %v718 = vpack.c.b16 %v598, %v594
    %v719 = vpack.c.b16 %v599, %v595
    %v720 = vpack.c.b16 %v604, %v600
    %v721 = vpack.c.b16 %v605, %v601
    %v722 = vpack.c.b16 %v606, %v602
    %v723 = vpack.c.b16 %v607, %v603
    %v724 = vpack.c.b16 %v612, %v608
    %v725 = vpack.c.b16 %v613, %v609
    %v726 = vpack.c.b16 %v614, %v610
    %v727 = vpack.c.b16 %v615, %v611
    %v728 = vpack.c.b16 %v620, %v616
    %v729 = vpack.c.b16 %v621, %v617
    %v730 = vpack.c.b16 %v622, %v618
    %v731 = vpack.c.b16 %v623, %v619
    %v732 = vpack.c.b16 %v628, %v624
    %v733 = vpack.c.b16 %v629, %v625
    %v734 = vpack.c.b16 %v630, %v626
    %v735 = vpack.c.b16 %v631, %v627
    %v736 = vpack.c.b16 %v636, %v632
    %v737 = vpack.c.b16 %v637, %v633
    %v738 = vpack.c.b16 %v638, %v634
    %v739 = vpack.c.b16 %v639, %v635
    %vm840 = vcmask 130048
    %v842 = vsel %vm840, %v217, 0
    %844 = vmatprep.subr.bf16.mxu0 %v669
    %845 = vmatpush1.bf16.msra.mxu0 %v668
    %846 = vmatprep.subr.bf16.mxu0 %v665
    %847 = vmatpush1.bf16.msra.mxu0 %v664
    %848 = vmatprep.subr.bf16.mxu0 %v661
    %849 = vmatpush1.bf16.msra.mxu0 %v660
    %850 = vmatprep.subr.bf16.mxu0 %v657
    %851 = vmatpush1.bf16.msra.mxu0 %v656
    %852 = vmatprep.subr.bf16.mxu0 %v653
    %853 = vmatpush1.bf16.msra.mxu0 %v652
    %854 = vmatprep.subr.bf16.mxu0 %v649
    %855 = vmatpush1.bf16.msra.mxu0 %v648
    %856 = vmatprep.subr.bf16.mxu0 %v645
    %857 = vmatpush1.bf16.msra.mxu0 %v644
    %858 = vmatprep.subr.bf16.mxu0 %v641
    %859 = vmatpush1.bf16.msra.mxu0 %v640
    %860 = vmatprep.subr.bf16.mxu0 %v701
    %861 = vmatpush2.bf16.msra.mxu0 %v700
    %862 = vmatprep.subr.bf16.mxu0 %v697
    %863 = vmatpush2.bf16.msra.mxu0 %v696
    %864 = vmatprep.subr.bf16.mxu0 %v693
    %865 = vmatpush2.bf16.msra.mxu0 %v692
    %866 = vmatprep.subr.bf16.mxu0 %v689
    %867 = vmatpush2.bf16.msra.mxu0 %v688
    %868 = vmatprep.subr.bf16.mxu0 %v685
    %869 = vmatpush2.bf16.msra.mxu0 %v684
    %870 = vmatprep.subr.bf16.mxu0 %v681
    %871 = vmatpush2.bf16.msra.mxu0 %v680
    %872 = vmatprep.subr.bf16.mxu0 %v677
    %873 = vmatpush2.bf16.msra.mxu0 %v676
    %874 = vmatprep.subr.bf16.mxu0 %v673
    %875 = vmatpush2.bf16.msra.mxu0 %v672
    %876 = vmatprep.mubr.bf16.mxu0 %v215
    %877 = vmatmul.mubr.bf16.gmra.mxu0 %v214
    %v878 = vpop.f32.mrf.mxu0
    %v879 = vadd.f32 %v323, %v878
    %v880 = vpop.f32.mrf.mxu0
    %v881 = vadd.f32 %v327, %v880
    %v882 = vpop.f32.mrf.mxu0
    %v883 = vpop.f32.mrf.mxu0
    %884 = vdwg.mxu0
    %885 = vmatprep.subr.bf16.mxu0 %v733
    %886 = vmatpush1.bf16.msra.mxu0 %v732
    %887 = vmatprep.subr.bf16.mxu0 %v729
    %888 = vmatpush1.bf16.msra.mxu0 %v728
    %889 = vmatprep.subr.bf16.mxu0 %v725
    %890 = vmatpush1.bf16.msra.mxu0 %v724
    %891 = vmatprep.subr.bf16.mxu0 %v721
    %892 = vmatpush1.bf16.msra.mxu0 %v720
    %893 = vmatprep.subr.bf16.mxu0 %v717
    %894 = vmatpush1.bf16.msra.mxu0 %v716
    %895 = vmatprep.subr.bf16.mxu0 %v713
    %896 = vmatpush1.bf16.msra.mxu0 %v712
    %897 = vmatprep.subr.bf16.mxu0 %v709
    %898 = vmatpush1.bf16.msra.mxu0 %v708
    %899 = vmatprep.subr.bf16.mxu0 %v705
    %900 = vmatpush1.bf16.msra.mxu0 %v704
    %901 = vmatprep.subr.bf16.mxu0 0
    %902 = vmatpush2.bf16.msra.mxu0 0
    %903 = vmatprep.subr.bf16.mxu0 0
    %904 = vmatpush2.bf16.msra.mxu0 0
    %905 = vmatprep.subr.bf16.mxu0 0
    %906 = vmatpush2.bf16.msra.mxu0 0
    %907 = vmatprep.subr.bf16.mxu0 0
    %908 = vmatpush2.bf16.msra.mxu0 0
    %909 = vmatprep.subr.bf16.mxu0 0
    %910 = vmatpush2.bf16.msra.mxu0 0
    %911 = vmatprep.subr.bf16.mxu0 0
    %912 = vmatpush2.bf16.msra.mxu0 0
    %913 = vmatprep.subr.bf16.mxu0 0
    %914 = vmatpush2.bf16.msra.mxu0 0
    %915 = vmatprep.subr.bf16.mxu0 %v737
    %916 = vmatpush2.bf16.msra.mxu0 %v736
    %917 = vmatprep.mubr.bf16.mxu0 %v842
    %918 = vmatmul.mubr.bf16.gmra.mxu0 %v216
    %v919 = vpop.f32.mrf.mxu0
    %v920 = vadd.f32 %v879, %v919
    %v921 = vpop.f32.mrf.mxu0
    %v922 = vadd.f32 %v881, %v921
    %v923 = vpop.f32.mrf.mxu0
    %v924 = vpop.f32.mrf.mxu0
    %925 = vdwg.mxu0
    %926 = vmatprep.subr.bf16.mxu0 %v671
    %927 = vmatpush1.bf16.msra.mxu0 %v670
    %928 = vmatprep.subr.bf16.mxu0 %v667
    %929 = vmatpush1.bf16.msra.mxu0 %v666
    %930 = vmatprep.subr.bf16.mxu0 %v663
    %931 = vmatpush1.bf16.msra.mxu0 %v662
    %932 = vmatprep.subr.bf16.mxu0 %v659
    %933 = vmatpush1.bf16.msra.mxu0 %v658
    %934 = vmatprep.subr.bf16.mxu0 %v655
    %935 = vmatpush1.bf16.msra.mxu0 %v654
    %936 = vmatprep.subr.bf16.mxu0 %v651
    %937 = vmatpush1.bf16.msra.mxu0 %v650
    %938 = vmatprep.subr.bf16.mxu0 %v647
    %939 = vmatpush1.bf16.msra.mxu0 %v646
    %940 = vmatprep.subr.bf16.mxu0 %v643
    %941 = vmatpush1.bf16.msra.mxu0 %v642
    %942 = vmatprep.subr.bf16.mxu0 %v703
    %943 = vmatpush2.bf16.msra.mxu0 %v702
    %944 = vmatprep.subr.bf16.mxu0 %v699
    %945 = vmatpush2.bf16.msra.mxu0 %v698
    %946 = vmatprep.subr.bf16.mxu0 %v695
    %947 = vmatpush2.bf16.msra.mxu0 %v694
    %948 = vmatprep.subr.bf16.mxu0 %v691
    %949 = vmatpush2.bf16.msra.mxu0 %v690
    %950 = vmatprep.subr.bf16.mxu0 %v687
    %951 = vmatpush2.bf16.msra.mxu0 %v686
    %952 = vmatprep.subr.bf16.mxu0 %v683
    %953 = vmatpush2.bf16.msra.mxu0 %v682
    %954 = vmatprep.subr.bf16.mxu0 %v679
    %955 = vmatpush2.bf16.msra.mxu0 %v678
    %956 = vmatprep.subr.bf16.mxu0 %v675
    %957 = vmatpush2.bf16.msra.mxu0 %v674
    %958 = vmatprep.mubr.bf16.mxu0 %v215
    %959 = vmatmul.mubr.bf16.gmra.mxu0 %v214
    %v960 = vpop.f32.mrf.mxu0
    %v961 = vadd.f32 %v331, %v960
    %v962 = vpop.f32.mrf.mxu0
    %v963 = vadd.f32 %v335, %v962
    %v964 = vpop.f32.mrf.mxu0
    %v965 = vpop.f32.mrf.mxu0
    %966 = vdwg.mxu0
    %967 = vmatprep.subr.bf16.mxu0 %v735
    %968 = vmatpush1.bf16.msra.mxu0 %v734
    %969 = vmatprep.subr.bf16.mxu0 %v731
    %970 = vmatpush1.bf16.msra.mxu0 %v730
    %971 = vmatprep.subr.bf16.mxu0 %v727
    %972 = vmatpush1.bf16.msra.mxu0 %v726
    %973 = vmatprep.subr.bf16.mxu0 %v723
    %974 = vmatpush1.bf16.msra.mxu0 %v722
    %975 = vmatprep.subr.bf16.mxu0 %v719
    %976 = vmatpush1.bf16.msra.mxu0 %v718
    %977 = vmatprep.subr.bf16.mxu0 %v715
    %978 = vmatpush1.bf16.msra.mxu0 %v714
    %979 = vmatprep.subr.bf16.mxu0 %v711
    %980 = vmatpush1.bf16.msra.mxu0 %v710
    %981 = vmatprep.subr.bf16.mxu0 %v707
    %982 = vmatpush1.bf16.msra.mxu0 %v706
    %983 = vmatprep.subr.bf16.mxu0 0
    %984 = vmatpush2.bf16.msra.mxu0 0
    %985 = vmatprep.subr.bf16.mxu0 0
    %986 = vmatpush2.bf16.msra.mxu0 0
    %987 = vmatprep.subr.bf16.mxu0 0
    %988 = vmatpush2.bf16.msra.mxu0 0
    %989 = vmatprep.subr.bf16.mxu0 0
    %990 = vmatpush2.bf16.msra.mxu0 0
    %991 = vmatprep.subr.bf16.mxu0 0
    %992 = vmatpush2.bf16.msra.mxu0 0
    %993 = vmatprep.subr.bf16.mxu0 0
    %994 = vmatpush2.bf16.msra.mxu0 0
    %995 = vmatprep.subr.bf16.mxu0 0
    %996 = vmatpush2.bf16.msra.mxu0 0
    %997 = vmatprep.subr.bf16.mxu0 %v739
    %998 = vmatpush2.bf16.msra.mxu0 %v738
    %999 = vmatprep.mubr.bf16.mxu0 %v842
    %1000 = vmatmul.mubr.bf16.gmra.mxu0 %v216
    %v1001 = vpop.f32.mrf.mxu0
    %v1002 = vadd.f32 %v961, %v1001
    %v1003 = vpop.f32.mrf.mxu0
    %v1004 = vadd.f32 %v963, %v1003
    %v1005 = vpop.f32.mrf.mxu0
    %v1006 = vpop.f32.mrf.mxu0
    %1007 = vdwg.mxu0
    %v1008 = vmax.f32 %v920, 0.0
    %v1009 = vmax.f32 %v922, 0.0
    %v1010 = vmax.f32 %v1002, 0.0
    %v1011 = vmax.f32 %v1004, 0.0
    %v1012 = vpack.c.bf16 %v1008, %v1008
    %v1013 = vpack.c.bf16 %v1009, %v1009
    %v1014 = vpack.c.bf16 %v1010, %v1010
    %v1015 = vpack.c.bf16 %v1011, %v1011
    %v1016 = vld [vmem:[#allocation6] sm:$0xff]
    %v1017 = vld [vmem:[#allocation6 + $0x8] sm:$0xff]
    %v1018 = vld [vmem:[#allocation6 + $0x10] sm:$0xff]
    %v1019 = vld [vmem:[#allocation6 + $0x18] sm:$0xf]
    %v1020 = vld [vmem:[#allocation6 + $0x1c] sm:$0xff]
    %v1021 = vld [vmem:[#allocation6 + $0x24] sm:$0xff]
    %v1022 = vld [vmem:[#allocation6 + $0x2c] sm:$0xff]
    %v1023 = vld [vmem:[#allocation6 + $0x34] sm:$0xf]
    %v1024 = vld [vmem:[#allocation6 + $0x38] sm:$0xff]
    %v1025 = vld [vmem:[#allocation6 + $0x40] sm:$0xff]
    %v1026 = vld [vmem:[#allocation6 + $0x48] sm:$0xff]
    %v1027 = vld [vmem:[#allocation6 + $0x50] sm:$0xf]
    %v1028 = vld [vmem:[#allocation6 + $0x54] sm:$0xff]
    %v1029 = vld [vmem:[#allocation6 + $0x5c] sm:$0xff]
    %v1030 = vld [vmem:[#allocation6 + $0x64] sm:$0xff]
    %v1031 = vld [vmem:[#allocation6 + $0x6c] sm:$0xf]
    %v1032 = vld [vmem:[#allocation6 + $0x70] sm:$0xff]
    %v1033 = vld [vmem:[#allocation6 + $0x78] sm:$0xff]
    %v1034 = vld [vmem:[#allocation6 + $0x80] sm:$0xff]
    %v1035 = vld [vmem:[#allocation6 + $0x88] sm:$0xf]
    %v1036 = vld [vmem:[#allocation6 + $0x8c] sm:$0xff]
    %v1037 = vld [vmem:[#allocation6 + $0x94] sm:$0xff]
    %v1038 = vld [vmem:[#allocation6 + $0x9c] sm:$0xff]
    %v1039 = vld [vmem:[#allocation6 + $0xa4] sm:$0xf]
    %v1040 = vld [vmem:[#allocation6 + $0xa8] sm:$0xff]
    %v1041 = vld [vmem:[#allocation6 + $0xb0] sm:$0xff]
    %v1042 = vld [vmem:[#allocation6 + $0xb8] sm:$0xff]
    %v1043 = vld [vmem:[#allocation6 + $0xc0] sm:$0xf]
    %v1044 = vld [vmem:[#allocation6 + $0xc4] sm:$0xff]
    %v1045 = vld [vmem:[#allocation6 + $0xcc] sm:$0xff]
    %v1046 = vld [vmem:[#allocation6 + $0xd4] sm:$0xff]
    %v1047 = vld [vmem:[#allocation6 + $0xdc] sm:$0xf]
    %v1048 = vld [vmem:[#allocation6 + $0xe0] sm:$0xff]
    %v1049 = vld [vmem:[#allocation6 + $0xe8] sm:$0xff]
    %v1050 = vld [vmem:[#allocation6 + $0xf0] sm:$0xff]
    %v1051 = vld [vmem:[#allocation6 + $0xf8] sm:$0xf]
    %v1052 = vld [vmem:[#allocation6 + $0xfc] sm:$0xff]
    %v1053 = vld [vmem:[#allocation6 + $0x104] sm:$0xff]
    %v1054 = vld [vmem:[#allocation6 + $0x10c] sm:$0xff]
    %v1055 = vld [vmem:[#allocation6 + $0x114] sm:$0xf]
    %v1056 = vld [vmem:[#allocation6 + $0x118] sm:$0xff]
    %v1057 = vld [vmem:[#allocation6 + $0x120] sm:$0xff]
    %v1058 = vld [vmem:[#allocation6 + $0x128] sm:$0xff]
    %v1059 = vld [vmem:[#allocation6 + $0x130] sm:$0xf]
    %v1060 = vld [vmem:[#allocation6 + $0x134] sm:$0xff]
    %v1061 = vld [vmem:[#allocation6 + $0x13c] sm:$0xff]
    %v1062 = vld [vmem:[#allocation6 + $0x144] sm:$0xff]
    %v1063 = vld [vmem:[#allocation6 + $0x14c] sm:$0xf]
    %v1064 = vld [vmem:[#allocation6 + $0x150] sm:$0xff]
    %v1065 = vld [vmem:[#allocation6 + $0x158] sm:$0xff]
    %v1066 = vld [vmem:[#allocation6 + $0x160] sm:$0xff]
    %v1067 = vld [vmem:[#allocation6 + $0x168] sm:$0xf]
    %v1068 = vld [vmem:[#allocation6 + $0x16c] sm:$0xff]
    %v1069 = vld [vmem:[#allocation6 + $0x174] sm:$0xff]
    %v1070 = vld [vmem:[#allocation6 + $0x17c] sm:$0xff]
    %v1071 = vld [vmem:[#allocation6 + $0x184] sm:$0xf]
    %v1072 = vld [vmem:[#allocation6 + $0x188] sm:$0xff]
    %v1073 = vld [vmem:[#allocation6 + $0x190] sm:$0xff]
    %v1074 = vld [vmem:[#allocation6 + $0x198] sm:$0xff]
    %v1075 = vld [vmem:[#allocation6 + $0x1a0] sm:$0xf]
    %v1076 = vld [vmem:[#allocation6 + $0x1a4] sm:$0xff]
    %v1077 = vld [vmem:[#allocation6 + $0x1ac] sm:$0xff]
    %v1078 = vld [vmem:[#allocation6 + $0x1b4] sm:$0xff]
    %v1079 = vld [vmem:[#allocation6 + $0x1bc] sm:$0xf]
    %v1080 = vld [vmem:[#allocation6 + $0x1c0] sm:$0xff]
    %v1081 = vld [vmem:[#allocation6 + $0x1c8] sm:$0xff]
    %v1082 = vld [vmem:[#allocation6 + $0x1d0] sm:$0xff]
    %v1083 = vld [vmem:[#allocation6 + $0x1d8] sm:$0xf]
    %v1084 = vld [vmem:[#allocation6 + $0x1dc] sm:$0xff]
    %v1085 = vld [vmem:[#allocation6 + $0x1e4] sm:$0xff]
    %v1086 = vld [vmem:[#allocation6 + $0x1ec] sm:$0xff]
    %v1087 = vld [vmem:[#allocation6 + $0x1f4] sm:$0xf]
    %v1088 = vld [vmem:[#allocation6 + $0x1f8] sm:$0xff]
    %v1089 = vld [vmem:[#allocation6 + $0x200] sm:$0xff]
    %v1090 = vld [vmem:[#allocation6 + $0x208] sm:$0xff]
    %v1091 = vld [vmem:[#allocation6 + $0x210] sm:$0xf]
    %v1092 = vld [vmem:[#allocation6 + $0x214] sm:$0xff]
    %v1093 = vld [vmem:[#allocation6 + $0x21c] sm:$0xff]
    %v1094 = vld [vmem:[#allocation6 + $0x224] sm:$0xff]
    %v1095 = vld [vmem:[#allocation6 + $0x22c] sm:$0xf]
    %v1096 = vld [vmem:[#allocation6 + $0x230] sm:$0xff]
    %v1097 = vld [vmem:[#allocation6 + $0x238] sm:$0xff]
    %v1098 = vld [vmem:[#allocation6 + $0x240] sm:$0xff]
    %v1099 = vld [vmem:[#allocation6 + $0x248] sm:$0xf]
    %v1100 = vld [vmem:[#allocation6 + $0x24c] sm:$0xff]
    %v1101 = vld [vmem:[#allocation6 + $0x254] sm:$0xff]
    %v1102 = vld [vmem:[#allocation6 + $0x25c] sm:$0xff]
    %v1103 = vld [vmem:[#allocation6 + $0x264] sm:$0xf]
    %v1104 = vld [vmem:[#allocation6 + $0x268] sm:$0xff]
    %v1105 = vld [vmem:[#allocation6 + $0x270] sm:$0xff]
    %v1106 = vld [vmem:[#allocation6 + $0x278] sm:$0xff]
    %v1107 = vld [vmem:[#allocation6 + $0x280] sm:$0xf]
    %v1108 = vld [vmem:[#allocation6 + $0x284] sm:$0xff]
    %v1109 = vld [vmem:[#allocation6 + $0x28c] sm:$0xff]
    %v1110 = vld [vmem:[#allocation6 + $0x294] sm:$0xff]
    %v1111 = vld [vmem:[#allocation6 + $0x29c] sm:$0xf]
    %v1112 = vld [vmem:[#allocation6 + $0x2a0] sm:$0xff]
    %v1113 = vld [vmem:[#allocation6 + $0x2a8] sm:$0xff]
    %v1114 = vld [vmem:[#allocation6 + $0x2b0] sm:$0xff]
    %v1115 = vld [vmem:[#allocation6 + $0x2b8] sm:$0xf]
    %v1116 = vld [vmem:[#allocation6 + $0x2bc] sm:$0xff]
    %v1117 = vld [vmem:[#allocation6 + $0x2c4] sm:$0xff]
    %v1118 = vld [vmem:[#allocation6 + $0x2cc] sm:$0xff]
    %v1119 = vld [vmem:[#allocation6 + $0x2d4] sm:$0xf]
    %v1120 = vld [vmem:[#allocation6 + $0x2d8] sm:$0xff]
    %v1121 = vld [vmem:[#allocation6 + $0x2e0] sm:$0xff]
    %v1122 = vld [vmem:[#allocation6 + $0x2e8] sm:$0xff]
    %v1123 = vld [vmem:[#allocation6 + $0x2f0] sm:$0xf]
    %v1124 = vld [vmem:[#allocation6 + $0x2f4] sm:$0xff]
    %v1125 = vld [vmem:[#allocation6 + $0x2fc] sm:$0xff]
    %v1126 = vld [vmem:[#allocation6 + $0x304] sm:$0xff]
    %v1127 = vld [vmem:[#allocation6 + $0x30c] sm:$0xf]
    %v1128 = vld [vmem:[#allocation6 + $0x310] sm:$0xff]
    %v1129 = vld [vmem:[#allocation6 + $0x318] sm:$0xff]
    %v1130 = vld [vmem:[#allocation6 + $0x320] sm:$0xff]
    %v1131 = vld [vmem:[#allocation6 + $0x328] sm:$0xf]
    %v1132 = vld [vmem:[#allocation6 + $0x32c] sm:$0xff]
    %v1133 = vld [vmem:[#allocation6 + $0x334] sm:$0xff]
    %v1134 = vld [vmem:[#allocation6 + $0x33c] sm:$0xff]
    %v1135 = vld [vmem:[#allocation6 + $0x344] sm:$0xf]
    %v1136 = vld [vmem:[#allocation6 + $0x348] sm:$0xff]
    %v1137 = vld [vmem:[#allocation6 + $0x350] sm:$0xff]
    %v1138 = vld [vmem:[#allocation6 + $0x358] sm:$0xff]
    %v1139 = vld [vmem:[#allocation6 + $0x360] sm:$0xf]
    %v1140 = vld [vmem:[#allocation6 + $0x364] sm:$0xff]
    %v1141 = vld [vmem:[#allocation6 + $0x36c] sm:$0xff]
    %v1142 = vld [vmem:[#allocation6 + $0x374] sm:$0xff]
    %v1143 = vld [vmem:[#allocation6 + $0x37c] sm:$0xf]
    %v1144 = vld [vmem:[#allocation6 + $0x380] sm:$0xff]
    %v1145 = vld [vmem:[#allocation6 + $0x388] sm:$0xff]
    %v1146 = vld [vmem:[#allocation6 + $0x390] sm:$0xff]
    %v1147 = vld [vmem:[#allocation6 + $0x398] sm:$0xf]
    %v1148 = vld [vmem:[#allocation6 + $0x39c] sm:$0xff]
    %v1149 = vld [vmem:[#allocation6 + $0x3a4] sm:$0xff]
    %v1150 = vld [vmem:[#allocation6 + $0x3ac] sm:$0xff]
    %v1151 = vld [vmem:[#allocation6 + $0x3b4] sm:$0xf]
    %v1152 = vld [vmem:[#allocation6 + $0x3b8] sm:$0xff]
    %v1153 = vld [vmem:[#allocation6 + $0x3c0] sm:$0xff]
    %v1154 = vld [vmem:[#allocation6 + $0x3c8] sm:$0xff]
    %v1155 = vld [vmem:[#allocation6 + $0x3d0] sm:$0xf]
    %v1156 = vld [vmem:[#allocation6 + $0x3d4] sm:$0xff]
    %v1157 = vld [vmem:[#allocation6 + $0x3dc] sm:$0xff]
    %v1158 = vld [vmem:[#allocation6 + $0x3e4] sm:$0xff]
    %v1159 = vld [vmem:[#allocation6 + $0x3ec] sm:$0xf]
    %v1160 = vld [vmem:[#allocation6 + $0x3f0] sm:$0xff]
    %v1161 = vld [vmem:[#allocation6 + $0x3f8] sm:$0xff]
    %v1162 = vld [vmem:[#allocation6 + $0x400] sm:$0xff]
    %v1163 = vld [vmem:[#allocation6 + $0x408] sm:$0xf]
    %v1164 = vld [vmem:[#allocation6 + $0x40c] sm:$0xff]
    %v1165 = vld [vmem:[#allocation6 + $0x414] sm:$0xff]
    %v1166 = vld [vmem:[#allocation6 + $0x41c] sm:$0xff]
    %v1167 = vld [vmem:[#allocation6 + $0x424] sm:$0xf]
    %v1168 = vld [vmem:[#allocation6 + $0x428] sm:$0xff]
    %v1169 = vld [vmem:[#allocation6 + $0x430] sm:$0xff]
    %v1170 = vld [vmem:[#allocation6 + $0x438] sm:$0xff]
    %v1171 = vld [vmem:[#allocation6 + $0x440] sm:$0xf]
    %v1172 = vld [vmem:[#allocation6 + $0x444] sm:$0xff]
    %v1173 = vld [vmem:[#allocation6 + $0x44c] sm:$0xff]
    %v1174 = vld [vmem:[#allocation6 + $0x454] sm:$0xff]
    %v1175 = vld [vmem:[#allocation6 + $0x45c] sm:$0xf]
    %v1176 = vld [vmem:[#allocation6 + $0x460] sm:$0xff]
    %v1177 = vld [vmem:[#allocation6 + $0x468] sm:$0xff]
    %v1178 = vld [vmem:[#allocation6 + $0x470] sm:$0xff]
    %v1179 = vld [vmem:[#allocation6 + $0x478] sm:$0xf]
    %v1180 = vld [vmem:[#allocation6 + $0x47c] sm:$0xff]
    %v1181 = vld [vmem:[#allocation6 + $0x484] sm:$0xff]
    %v1182 = vld [vmem:[#allocation6 + $0x48c] sm:$0xff]
    %v1183 = vld [vmem:[#allocation6 + $0x494] sm:$0xf]
    %v1184 = vld [vmem:[#allocation6 + $0x498] sm:$0xff]
    %v1185 = vld [vmem:[#allocation6 + $0x4a0] sm:$0xff]
    %v1186 = vld [vmem:[#allocation6 + $0x4a8] sm:$0xff]
    %v1187 = vld [vmem:[#allocation6 + $0x4b0] sm:$0xf]
    %v1188 = vld [vmem:[#allocation6 + $0x4b4] sm:$0xff]
    %v1189 = vld [vmem:[#allocation6 + $0x4bc] sm:$0xff]
    %v1190 = vld [vmem:[#allocation6 + $0x4c4] sm:$0xff]
    %v1191 = vld [vmem:[#allocation6 + $0x4cc] sm:$0xf]
    %v1192 = vld [vmem:[#allocation6 + $0x4d0] sm:$0xff]
    %v1193 = vld [vmem:[#allocation6 + $0x4d8] sm:$0xff]
    %v1194 = vld [vmem:[#allocation6 + $0x4e0] sm:$0xff]
    %v1195 = vld [vmem:[#allocation6 + $0x4e8] sm:$0xf]
    %v1196 = vld [vmem:[#allocation6 + $0x4ec] sm:$0xff]
    %v1197 = vld [vmem:[#allocation6 + $0x4f4] sm:$0xff]
    %v1198 = vld [vmem:[#allocation6 + $0x4fc] sm:$0xff]
    %v1199 = vld [vmem:[#allocation6 + $0x504] sm:$0xf]
    %v1200 = vld [vmem:[#allocation6 + $0x508] sm:$0xff]
    %v1201 = vld [vmem:[#allocation6 + $0x510] sm:$0xff]
    %v1202 = vld [vmem:[#allocation6 + $0x518] sm:$0xff]
    %v1203 = vld [vmem:[#allocation6 + $0x520] sm:$0xf]
    %v1204 = vld [vmem:[#allocation6 + $0x524] sm:$0xff]
    %v1205 = vld [vmem:[#allocation6 + $0x52c] sm:$0xff]
    %v1206 = vld [vmem:[#allocation6 + $0x534] sm:$0xff]
    %v1207 = vld [vmem:[#allocation6 + $0x53c] sm:$0xf]
    %v1208 = vld [vmem:[#allocation6 + $0x540] sm:$0xff]
    %v1209 = vld [vmem:[#allocation6 + $0x548] sm:$0xff]
    %v1210 = vld [vmem:[#allocation6 + $0x550] sm:$0xff]
    %v1211 = vld [vmem:[#allocation6 + $0x558] sm:$0xf]
    %v1212 = vld [vmem:[#allocation6 + $0x55c] sm:$0xff]
    %v1213 = vld [vmem:[#allocation6 + $0x564] sm:$0xff]
    %v1214 = vld [vmem:[#allocation6 + $0x56c] sm:$0xff]
    %v1215 = vld [vmem:[#allocation6 + $0x574] sm:$0xf]
    %v1216 = vld [vmem:[%s6] sm:$0x7f]
    %v1218 = vlaneseq
    %v1219 = vshrl.u32 %v1218, 7
    %v1220 = vsub.s32 0, %v1219
    %v1221 = vrot.slane %v1216, %v1220
    %v1222 = vlaneseq
    %v1223 = vshrl.u32 %v1222, 7
    %v1224 = vsub.s32 1, %v1223
    %v1225 = vrot.slane %v1216, %v1224
    %v1226 = vlaneseq
    %v1227 = vshrl.u32 %v1226, 7
    %v1228 = vsub.s32 2, %v1227
    %v1229 = vrot.slane %v1216, %v1228
    %v1230 = vlaneseq
    %v1231 = vshrl.u32 %v1230, 7
    %v1232 = vsub.s32 3, %v1231
    %v1233 = vrot.slane %v1216, %v1232
    %v1234 = vlaneseq
    %v1235 = vshrl.u32 %v1234, 7
    %v1236 = vsub.s32 4, %v1235
    %v1237 = vrot.slane %v1216, %v1236
    %v1238 = vlaneseq
    %v1239 = vshrl.u32 %v1238, 7
    %v1240 = vsub.s32 5, %v1239
    %v1241 = vrot.slane %v1216, %v1240
    %v1242 = vlaneseq
    %v1243 = vshrl.u32 %v1242, 7
    %v1244 = vsub.s32 6, %v1243
    %v1245 = vrot.slane %v1216, %v1244
    %v1453 = vunpack.c.l.b16 %v1016
    %v1454 = vunpack.c.h.b16 %v1016
    %v1455 = vunpack.c.l.b16 %v1017
    %v1456 = vunpack.c.h.b16 %v1017
    %v1457 = vunpack.c.l.b16 %v1018
    %v1458 = vunpack.c.h.b16 %v1018
    %v1459 = vunpack.c.l.b16 %v1019
    %v1460 = vunpack.c.l.b16 %v1020
    %v1461 = vunpack.c.h.b16 %v1020
    %v1462 = vunpack.c.l.b16 %v1021
    %v1463 = vunpack.c.h.b16 %v1021
    %v1464 = vunpack.c.l.b16 %v1022
    %v1465 = vunpack.c.h.b16 %v1022
    %v1466 = vunpack.c.l.b16 %v1023
    %v1467 = vunpack.c.l.b16 %v1024
    %v1468 = vunpack.c.h.b16 %v1024
    %v1469 = vunpack.c.l.b16 %v1025
    %v1470 = vunpack.c.h.b16 %v1025
    %v1471 = vunpack.c.l.b16 %v1026
    %v1472 = vunpack.c.h.b16 %v1026
    %v1473 = vunpack.c.l.b16 %v1027
    %v1474 = vunpack.c.l.b16 %v1028
    %v1475 = vunpack.c.h.b16 %v1028
    %v1476 = vunpack.c.l.b16 %v1029
    %v1477 = vunpack.c.h.b16 %v1029
    %v1478 = vunpack.c.l.b16 %v1030
    %v1479 = vunpack.c.h.b16 %v1030
    %v1480 = vunpack.c.l.b16 %v1031
    %v1481 = vunpack.c.l.b16 %v1032
    %v1482 = vunpack.c.h.b16 %v1032
    %v1483 = vunpack.c.l.b16 %v1033
    %v1484 = vunpack.c.h.b16 %v1033
    %v1485 = vunpack.c.l.b16 %v1034
    %v1486 = vunpack.c.h.b16 %v1034
    %v1487 = vunpack.c.l.b16 %v1035
    %v1488 = vunpack.c.l.b16 %v1036
    %v1489 = vunpack.c.h.b16 %v1036
    %v1490 = vunpack.c.l.b16 %v1037
    %v1491 = vunpack.c.h.b16 %v1037
    %v1492 = vunpack.c.l.b16 %v1038
    %v1493 = vunpack.c.h.b16 %v1038
    %v1494 = vunpack.c.l.b16 %v1039
    %v1495 = vunpack.c.l.b16 %v1040
    %v1496 = vunpack.c.h.b16 %v1040
    %v1497 = vunpack.c.l.b16 %v1041
    %v1498 = vunpack.c.h.b16 %v1041
    %v1499 = vunpack.c.l.b16 %v1042
    %v1500 = vunpack.c.h.b16 %v1042
    %v1501 = vunpack.c.l.b16 %v1043
    %v1502 = vunpack.c.l.b16 %v1044
    %v1503 = vunpack.c.h.b16 %v1044
    %v1504 = vunpack.c.l.b16 %v1045
    %v1505 = vunpack.c.h.b16 %v1045
    %v1506 = vunpack.c.l.b16 %v1046
    %v1507 = vunpack.c.h.b16 %v1046
    %v1508 = vunpack.c.l.b16 %v1047
    %v1509 = vunpack.c.l.b16 %v1048
    %v1510 = vunpack.c.h.b16 %v1048
    %v1511 = vunpack.c.l.b16 %v1049
    %v1512 = vunpack.c.h.b16 %v1049
    %v1513 = vunpack.c.l.b16 %v1050
    %v1514 = vunpack.c.h.b16 %v1050
    %v1515 = vunpack.c.l.b16 %v1051
    %v1516 = vunpack.c.l.b16 %v1052
    %v1517 = vunpack.c.h.b16 %v1052
    %v1518 = vunpack.c.l.b16 %v1053
    %v1519 = vunpack.c.h.b16 %v1053
    %v1520 = vunpack.c.l.b16 %v1054
    %v1521 = vunpack.c.h.b16 %v1054
    %v1522 = vunpack.c.l.b16 %v1055
    %v1523 = vunpack.c.l.b16 %v1056
    %v1524 = vunpack.c.h.b16 %v1056
    %v1525 = vunpack.c.l.b16 %v1057
    %v1526 = vunpack.c.h.b16 %v1057
    %v1527 = vunpack.c.l.b16 %v1058
    %v1528 = vunpack.c.h.b16 %v1058
    %v1529 = vunpack.c.l.b16 %v1059
    %v1530 = vunpack.c.l.b16 %v1060
    %v1531 = vunpack.c.h.b16 %v1060
    %v1532 = vunpack.c.l.b16 %v1061
    %v1533 = vunpack.c.h.b16 %v1061
    %v1534 = vunpack.c.l.b16 %v1062
    %v1535 = vunpack.c.h.b16 %v1062
    %v1536 = vunpack.c.l.b16 %v1063
    %v1537 = vunpack.c.l.b16 %v1064
    %v1538 = vunpack.c.h.b16 %v1064
    %v1539 = vunpack.c.l.b16 %v1065
    %v1540 = vunpack.c.h.b16 %v1065
    %v1541 = vunpack.c.l.b16 %v1066
    %v1542 = vunpack.c.h.b16 %v1066
    %v1543 = vunpack.c.l.b16 %v1067
    %v1544 = vunpack.c.l.b16 %v1068
    %v1545 = vunpack.c.h.b16 %v1068
    %v1546 = vunpack.c.l.b16 %v1069
    %v1547 = vunpack.c.h.b16 %v1069
    %v1548 = vunpack.c.l.b16 %v1070
    %v1549 = vunpack.c.h.b16 %v1070
    %v1550 = vunpack.c.l.b16 %v1071
    %v1551 = vunpack.c.l.b16 %v1072
    %v1552 = vunpack.c.h.b16 %v1072
    %v1553 = vunpack.c.l.b16 %v1073
    %v1554 = vunpack.c.h.b16 %v1073
    %v1555 = vunpack.c.l.b16 %v1074
    %v1556 = vunpack.c.h.b16 %v1074
    %v1557 = vunpack.c.l.b16 %v1075
    %v1558 = vunpack.c.l.b16 %v1076
    %v1559 = vunpack.c.h.b16 %v1076
    %v1560 = vunpack.c.l.b16 %v1077
    %v1561 = vunpack.c.h.b16 %v1077
    %v1562 = vunpack.c.l.b16 %v1078
    %v1563 = vunpack.c.h.b16 %v1078
    %v1564 = vunpack.c.l.b16 %v1079
    %v1565 = vunpack.c.l.b16 %v1080
    %v1566 = vunpack.c.h.b16 %v1080
    %v1567 = vunpack.c.l.b16 %v1081
    %v1568 = vunpack.c.h.b16 %v1081
    %v1569 = vunpack.c.l.b16 %v1082
    %v1570 = vunpack.c.h.b16 %v1082
    %v1571 = vunpack.c.l.b16 %v1083
    %v1572 = vunpack.c.l.b16 %v1084
    %v1573 = vunpack.c.h.b16 %v1084
    %v1574 = vunpack.c.l.b16 %v1085
    %v1575 = vunpack.c.h.b16 %v1085
    %v1576 = vunpack.c.l.b16 %v1086
    %v1577 = vunpack.c.h.b16 %v1086
    %v1578 = vunpack.c.l.b16 %v1087
    %v1579 = vunpack.c.l.b16 %v1088
    %v1580 = vunpack.c.h.b16 %v1088
    %v1581 = vunpack.c.l.b16 %v1089
    %v1582 = vunpack.c.h.b16 %v1089
    %v1583 = vunpack.c.l.b16 %v1090
    %v1584 = vunpack.c.h.b16 %v1090
    %v1585 = vunpack.c.l.b16 %v1091
    %v1586 = vunpack.c.l.b16 %v1092
    %v1587 = vunpack.c.h.b16 %v1092
    %v1588 = vunpack.c.l.b16 %v1093
    %v1589 = vunpack.c.h.b16 %v1093
    %v1590 = vunpack.c.l.b16 %v1094
    %v1591 = vunpack.c.h.b16 %v1094
    %v1592 = vunpack.c.l.b16 %v1095
    %v1593 = vunpack.c.l.b16 %v1096
    %v1594 = vunpack.c.h.b16 %v1096
    %v1595 = vunpack.c.l.b16 %v1097
    %v1596 = vunpack.c.h.b16 %v1097
    %v1597 = vunpack.c.l.b16 %v1098
    %v1598 = vunpack.c.h.b16 %v1098
    %v1599 = vunpack.c.l.b16 %v1099
    %v1600 = vunpack.c.l.b16 %v1100
    %v1601 = vunpack.c.h.b16 %v1100
    %v1602 = vunpack.c.l.b16 %v1101
    %v1603 = vunpack.c.h.b16 %v1101
    %v1604 = vunpack.c.l.b16 %v1102
    %v1605 = vunpack.c.h.b16 %v1102
    %v1606 = vunpack.c.l.b16 %v1103
    %v1607 = vunpack.c.l.b16 %v1104
    %v1608 = vunpack.c.h.b16 %v1104
    %v1609 = vunpack.c.l.b16 %v1105
    %v1610 = vunpack.c.h.b16 %v1105
    %v1611 = vunpack.c.l.b16 %v1106
    %v1612 = vunpack.c.h.b16 %v1106
    %v1613 = vunpack.c.l.b16 %v1107
    %v1614 = vunpack.c.l.b16 %v1108
    %v1615 = vunpack.c.h.b16 %v1108
    %v1616 = vunpack.c.l.b16 %v1109
    %v1617 = vunpack.c.h.b16 %v1109
    %v1618 = vunpack.c.l.b16 %v1110
    %v1619 = vunpack.c.h.b16 %v1110
    %v1620 = vunpack.c.l.b16 %v1111
    %v1621 = vunpack.c.l.b16 %v1112
    %v1622 = vunpack.c.h.b16 %v1112
    %v1623 = vunpack.c.l.b16 %v1113
    %v1624 = vunpack.c.h.b16 %v1113
    %v1625 = vunpack.c.l.b16 %v1114
    %v1626 = vunpack.c.h.b16 %v1114
    %v1627 = vunpack.c.l.b16 %v1115
    %v1628 = vunpack.c.l.b16 %v1116
    %v1629 = vunpack.c.h.b16 %v1116
    %v1630 = vunpack.c.l.b16 %v1117
    %v1631 = vunpack.c.h.b16 %v1117
    %v1632 = vunpack.c.l.b16 %v1118
    %v1633 = vunpack.c.h.b16 %v1118
    %v1634 = vunpack.c.l.b16 %v1119
    %v1635 = vunpack.c.l.b16 %v1120
    %v1636 = vunpack.c.h.b16 %v1120
    %v1637 = vunpack.c.l.b16 %v1121
    %v1638 = vunpack.c.h.b16 %v1121
    %v1639 = vunpack.c.l.b16 %v1122
    %v1640 = vunpack.c.h.b16 %v1122
    %v1641 = vunpack.c.l.b16 %v1123
    %v1642 = vunpack.c.l.b16 %v1124
    %v1643 = vunpack.c.h.b16 %v1124
    %v1644 = vunpack.c.l.b16 %v1125
    %v1645 = vunpack.c.h.b16 %v1125
    %v1646 = vunpack.c.l.b16 %v1126
    %v1647 = vunpack.c.h.b16 %v1126
    %v1648 = vunpack.c.l.b16 %v1127
    %v1649 = vunpack.c.l.b16 %v1128
    %v1650 = vunpack.c.h.b16 %v1128
    %v1651 = vunpack.c.l.b16 %v1129
    %v1652 = vunpack.c.h.b16 %v1129
    %v1653 = vunpack.c.l.b16 %v1130
    %v1654 = vunpack.c.h.b16 %v1130
    %v1655 = vunpack.c.l.b16 %v1131
    %v1656 = vunpack.c.l.b16 %v1132
    %v1657 = vunpack.c.h.b16 %v1132
    %v1658 = vunpack.c.l.b16 %v1133
    %v1659 = vunpack.c.h.b16 %v1133
    %v1660 = vunpack.c.l.b16 %v1134
    %v1661 = vunpack.c.h.b16 %v1134
    %v1662 = vunpack.c.l.b16 %v1135
    %v1663 = vunpack.c.l.b16 %v1136
    %v1664 = vunpack.c.h.b16 %v1136
    %v1665 = vunpack.c.l.b16 %v1137
    %v1666 = vunpack.c.h.b16 %v1137
    %v1667 = vunpack.c.l.b16 %v1138
    %v1668 = vunpack.c.h.b16 %v1138
    %v1669 = vunpack.c.l.b16 %v1139
    %v1670 = vunpack.c.l.b16 %v1140
    %v1671 = vunpack.c.h.b16 %v1140
    %v1672 = vunpack.c.l.b16 %v1141
    %v1673 = vunpack.c.h.b16 %v1141
    %v1674 = vunpack.c.l.b16 %v1142
    %v1675 = vunpack.c.h.b16 %v1142
    %v1676 = vunpack.c.l.b16 %v1143
    %v1677 = vunpack.c.l.b16 %v1144
    %v1678 = vunpack.c.h.b16 %v1144
    %v1679 = vunpack.c.l.b16 %v1145
    %v1680 = vunpack.c.h.b16 %v1145
    %v1681 = vunpack.c.l.b16 %v1146
    %v1682 = vunpack.c.h.b16 %v1146
    %v1683 = vunpack.c.l.b16 %v1147
    %v1684 = vunpack.c.l.b16 %v1148
    %v1685 = vunpack.c.h.b16 %v1148
    %v1686 = vunpack.c.l.b16 %v1149
    %v1687 = vunpack.c.h.b16 %v1149
    %v1688 = vunpack.c.l.b16 %v1150
    %v1689 = vunpack.c.h.b16 %v1150
    %v1690 = vunpack.c.l.b16 %v1151
    %v1691 = vunpack.c.l.b16 %v1152
    %v1692 = vunpack.c.h.b16 %v1152
    %v1693 = vunpack.c.l.b16 %v1153
    %v1694 = vunpack.c.h.b16 %v1153
    %v1695 = vunpack.c.l.b16 %v1154
    %v1696 = vunpack.c.h.b16 %v1154
    %v1697 = vunpack.c.l.b16 %v1155
    %v1698 = vunpack.c.l.b16 %v1156
    %v1699 = vunpack.c.h.b16 %v1156
    %v1700 = vunpack.c.l.b16 %v1157
    %v1701 = vunpack.c.h.b16 %v1157
    %v1702 = vunpack.c.l.b16 %v1158
    %v1703 = vunpack.c.h.b16 %v1158
    %v1704 = vunpack.c.l.b16 %v1159
    %v1705 = vunpack.c.l.b16 %v1160
    %v1706 = vunpack.c.h.b16 %v1160
    %v1707 = vunpack.c.l.b16 %v1161
    %v1708 = vunpack.c.h.b16 %v1161
    %v1709 = vunpack.c.l.b16 %v1162
    %v1710 = vunpack.c.h.b16 %v1162
    %v1711 = vunpack.c.l.b16 %v1163
    %v1712 = vunpack.c.l.b16 %v1164
    %v1713 = vunpack.c.h.b16 %v1164
    %v1714 = vunpack.c.l.b16 %v1165
    %v1715 = vunpack.c.h.b16 %v1165
    %v1716 = vunpack.c.l.b16 %v1166
    %v1717 = vunpack.c.h.b16 %v1166
    %v1718 = vunpack.c.l.b16 %v1167
    %v1719 = vunpack.c.l.b16 %v1168
    %v1720 = vunpack.c.h.b16 %v1168
    %v1721 = vunpack.c.l.b16 %v1169
    %v1722 = vunpack.c.h.b16 %v1169
    %v1723 = vunpack.c.l.b16 %v1170
    %v1724 = vunpack.c.h.b16 %v1170
    %v1725 = vunpack.c.l.b16 %v1171
    %v1726 = vunpack.c.l.b16 %v1172
    %v1727 = vunpack.c.h.b16 %v1172
    %v1728 = vunpack.c.l.b16 %v1173
    %v1729 = vunpack.c.h.b16 %v1173
    %v1730 = vunpack.c.l.b16 %v1174
    %v1731 = vunpack.c.h.b16 %v1174
    %v1732 = vunpack.c.l.b16 %v1175
    %v1733 = vunpack.c.l.b16 %v1176
    %v1734 = vunpack.c.h.b16 %v1176
    %v1735 = vunpack.c.l.b16 %v1177
    %v1736 = vunpack.c.h.b16 %v1177
    %v1737 = vunpack.c.l.b16 %v1178
    %v1738 = vunpack.c.h.b16 %v1178
    %v1739 = vunpack.c.l.b16 %v1179
    %v1740 = vunpack.c.l.b16 %v1180
    %v1741 = vunpack.c.h.b16 %v1180
    %v1742 = vunpack.c.l.b16 %v1181
    %v1743 = vunpack.c.h.b16 %v1181
    %v1744 = vunpack.c.l.b16 %v1182
    %v1745 = vunpack.c.h.b16 %v1182
    %v1746 = vunpack.c.l.b16 %v1183
    %v1747 = vunpack.c.l.b16 %v1184
    %v1748 = vunpack.c.h.b16 %v1184
    %v1749 = vunpack.c.l.b16 %v1185
    %v1750 = vunpack.c.h.b16 %v1185
    %v1751 = vunpack.c.l.b16 %v1186
    %v1752 = vunpack.c.h.b16 %v1186
    %v1753 = vunpack.c.l.b16 %v1187
    %v1754 = vunpack.c.l.b16 %v1188
    %v1755 = vunpack.c.h.b16 %v1188
    %v1756 = vunpack.c.l.b16 %v1189
    %v1757 = vunpack.c.h.b16 %v1189
    %v1758 = vunpack.c.l.b16 %v1190
    %v1759 = vunpack.c.h.b16 %v1190
    %v1760 = vunpack.c.l.b16 %v1191
    %v1761 = vunpack.c.l.b16 %v1192
    %v1762 = vunpack.c.h.b16 %v1192
    %v1763 = vunpack.c.l.b16 %v1193
    %v1764 = vunpack.c.h.b16 %v1193
    %v1765 = vunpack.c.l.b16 %v1194
    %v1766 = vunpack.c.h.b16 %v1194
    %v1767 = vunpack.c.l.b16 %v1195
    %v1768 = vunpack.c.l.b16 %v1196
    %v1769 = vunpack.c.h.b16 %v1196
    %v1770 = vunpack.c.l.b16 %v1197
    %v1771 = vunpack.c.h.b16 %v1197
    %v1772 = vunpack.c.l.b16 %v1198
    %v1773 = vunpack.c.h.b16 %v1198
    %v1774 = vunpack.c.l.b16 %v1199
    %v1775 = vunpack.c.l.b16 %v1200
    %v1776 = vunpack.c.h.b16 %v1200
    %v1777 = vunpack.c.l.b16 %v1201
    %v1778 = vunpack.c.h.b16 %v1201
    %v1779 = vunpack.c.l.b16 %v1202
    %v1780 = vunpack.c.h.b16 %v1202
    %v1781 = vunpack.c.l.b16 %v1203
    %v1782 = vunpack.c.l.b16 %v1204
    %v1783 = vunpack.c.h.b16 %v1204
    %v1784 = vunpack.c.l.b16 %v1205
    %v1785 = vunpack.c.h.b16 %v1205
    %v1786 = vunpack.c.l.b16 %v1206
    %v1787 = vunpack.c.h.b16 %v1206
    %v1788 = vunpack.c.l.b16 %v1207
    %v1789 = vunpack.c.l.b16 %v1208
    %v1790 = vunpack.c.h.b16 %v1208
    %v1791 = vunpack.c.l.b16 %v1209
    %v1792 = vunpack.c.h.b16 %v1209
    %v1793 = vunpack.c.l.b16 %v1210
    %v1794 = vunpack.c.h.b16 %v1210
    %v1795 = vunpack.c.l.b16 %v1211
    %v1796 = vunpack.c.l.b16 %v1212
    %v1797 = vunpack.c.h.b16 %v1212
    %v1798 = vunpack.c.l.b16 %v1213
    %v1799 = vunpack.c.h.b16 %v1213
    %v1800 = vunpack.c.l.b16 %v1214
    %v1801 = vunpack.c.h.b16 %v1214
    %v1802 = vunpack.c.l.b16 %v1215
    %v1803 = vpack.c.b16 %v1460, %v1453
    %v1804 = vpack.c.b16 %v1461, %v1454
    %v1805 = vpack.c.b16 %v1462, %v1455
    %v1806 = vpack.c.b16 %v1463, %v1456
    %v1807 = vpack.c.b16 %v1464, %v1457
    %v1808 = vpack.c.b16 %v1465, %v1458
    %v1809 = vpack.c.b16 %v1466, %v1459
    %v1810 = vpack.c.b16 %v1474, %v1467
    %v1811 = vpack.c.b16 %v1475, %v1468
    %v1812 = vpack.c.b16 %v1476, %v1469
    %v1813 = vpack.c.b16 %v1477, %v1470
    %v1814 = vpack.c.b16 %v1478, %v1471
    %v1815 = vpack.c.b16 %v1479, %v1472
    %v1816 = vpack.c.b16 %v1480, %v1473
    %v1817 = vpack.c.b16 %v1488, %v1481
    %v1818 = vpack.c.b16 %v1489, %v1482
    %v1819 = vpack.c.b16 %v1490, %v1483
    %v1820 = vpack.c.b16 %v1491, %v1484
    %v1821 = vpack.c.b16 %v1492, %v1485
    %v1822 = vpack.c.b16 %v1493, %v1486
    %v1823 = vpack.c.b16 %v1494, %v1487
    %v1824 = vpack.c.b16 %v1502, %v1495
    %v1825 = vpack.c.b16 %v1503, %v1496
    %v1826 = vpack.c.b16 %v1504, %v1497
    %v1827 = vpack.c.b16 %v1505, %v1498
    %v1828 = vpack.c.b16 %v1506, %v1499
    %v1829 = vpack.c.b16 %v1507, %v1500
    %v1830 = vpack.c.b16 %v1508, %v1501
    %v1831 = vpack.c.b16 %v1516, %v1509
    %v1832 = vpack.c.b16 %v1517, %v1510
    %v1833 = vpack.c.b16 %v1518, %v1511
    %v1834 = vpack.c.b16 %v1519, %v1512
    %v1835 = vpack.c.b16 %v1520, %v1513
    %v1836 = vpack.c.b16 %v1521, %v1514
    %v1837 = vpack.c.b16 %v1522, %v1515
    %v1838 = vpack.c.b16 %v1530, %v1523
    %v1839 = vpack.c.b16 %v1531, %v1524
    %v1840 = vpack.c.b16 %v1532, %v1525
    %v1841 = vpack.c.b16 %v1533, %v1526
    %v1842 = vpack.c.b16 %v1534, %v1527
    %v1843 = vpack.c.b16 %v1535, %v1528
    %v1844 = vpack.c.b16 %v1536, %v1529
    %v1845 = vpack.c.b16 %v1544, %v1537
    %v1846 = vpack.c.b16 %v1545, %v1538
    %v1847 = vpack.c.b16 %v1546, %v1539
    %v1848 = vpack.c.b16 %v1547, %v1540
    %v1849 = vpack.c.b16 %v1548, %v1541
    %v1850 = vpack.c.b16 %v1549, %v1542
    %v1851 = vpack.c.b16 %v1550, %v1543
    %v1852 = vpack.c.b16 %v1558, %v1551
    %v1853 = vpack.c.b16 %v1559, %v1552
    %v1854 = vpack.c.b16 %v1560, %v1553
    %v1855 = vpack.c.b16 %v1561, %v1554
    %v1856 = vpack.c.b16 %v1562, %v1555
    %v1857 = vpack.c.b16 %v1563, %v1556
    %v1858 = vpack.c.b16 %v1564, %v1557
    %v1859 = vpack.c.b16 %v1572, %v1565
    %v1860 = vpack.c.b16 %v1573, %v1566
    %v1861 = vpack.c.b16 %v1574, %v1567
    %v1862 = vpack.c.b16 %v1575, %v1568
    %v1863 = vpack.c.b16 %v1576, %v1569
    %v1864 = vpack.c.b16 %v1577, %v1570
    %v1865 = vpack.c.b16 %v1578, %v1571
    %v1866 = vpack.c.b16 %v1586, %v1579
    %v1867 = vpack.c.b16 %v1587, %v1580
    %v1868 = vpack.c.b16 %v1588, %v1581
    %v1869 = vpack.c.b16 %v1589, %v1582
    %v1870 = vpack.c.b16 %v1590, %v1583
    %v1871 = vpack.c.b16 %v1591, %v1584
    %v1872 = vpack.c.b16 %v1592, %v1585
    %v1873 = vpack.c.b16 %v1600, %v1593
    %v1874 = vpack.c.b16 %v1601, %v1594
    %v1875 = vpack.c.b16 %v1602, %v1595
    %v1876 = vpack.c.b16 %v1603, %v1596
    %v1877 = vpack.c.b16 %v1604, %v1597
    %v1878 = vpack.c.b16 %v1605, %v1598
    %v1879 = vpack.c.b16 %v1606, %v1599
    %v1880 = vpack.c.b16 %v1614, %v1607
    %v1881 = vpack.c.b16 %v1615, %v1608
    %v1882 = vpack.c.b16 %v1616, %v1609
    %v1883 = vpack.c.b16 %v1617, %v1610
    %v1884 = vpack.c.b16 %v1618, %v1611
    %v1885 = vpack.c.b16 %v1619, %v1612
    %v1886 = vpack.c.b16 %v1620, %v1613
    %v1887 = vpack.c.b16 %v1628, %v1621
    %v1888 = vpack.c.b16 %v1629, %v1622
    %v1889 = vpack.c.b16 %v1630, %v1623
    %v1890 = vpack.c.b16 %v1631, %v1624
    %v1891 = vpack.c.b16 %v1632, %v1625
    %v1892 = vpack.c.b16 %v1633, %v1626
    %v1893 = vpack.c.b16 %v1634, %v1627
    %v1894 = vpack.c.b16 %v1642, %v1635
    %v1895 = vpack.c.b16 %v1643, %v1636
    %v1896 = vpack.c.b16 %v1644, %v1637
    %v1897 = vpack.c.b16 %v1645, %v1638
    %v1898 = vpack.c.b16 %v1646, %v1639
    %v1899 = vpack.c.b16 %v1647, %v1640
    %v1900 = vpack.c.b16 %v1648, %v1641
    %v1901 = vpack.c.b16 %v1656, %v1649
    %v1902 = vpack.c.b16 %v1657, %v1650
    %v1903 = vpack.c.b16 %v1658, %v1651
    %v1904 = vpack.c.b16 %v1659, %v1652
    %v1905 = vpack.c.b16 %v1660, %v1653
    %v1906 = vpack.c.b16 %v1661, %v1654
    %v1907 = vpack.c.b16 %v1662, %v1655
    %v1908 = vpack.c.b16 %v1670, %v1663
    %v1909 = vpack.c.b16 %v1671, %v1664
    %v1910 = vpack.c.b16 %v1672, %v1665
    %v1911 = vpack.c.b16 %v1673, %v1666
    %v1912 = vpack.c.b16 %v1674, %v1667
    %v1913 = vpack.c.b16 %v1675, %v1668
    %v1914 = vpack.c.b16 %v1676, %v1669
    %v1915 = vpack.c.b16 %v1684, %v1677
    %v1916 = vpack.c.b16 %v1685, %v1678
    %v1917 = vpack.c.b16 %v1686, %v1679
    %v1918 = vpack.c.b16 %v1687, %v1680
    %v1919 = vpack.c.b16 %v1688, %v1681
    %v1920 = vpack.c.b16 %v1689, %v1682
    %v1921 = vpack.c.b16 %v1690, %v1683
    %v1922 = vpack.c.b16 %v1698, %v1691
    %v1923 = vpack.c.b16 %v1699, %v1692
    %v1924 = vpack.c.b16 %v1700, %v1693
    %v1925 = vpack.c.b16 %v1701, %v1694
    %v1926 = vpack.c.b16 %v1702, %v1695
    %v1927 = vpack.c.b16 %v1703, %v1696
    %v1928 = vpack.c.b16 %v1704, %v1697
    %v1929 = vpack.c.b16 %v1712, %v1705
    %v1930 = vpack.c.b16 %v1713, %v1706
    %v1931 = vpack.c.b16 %v1714, %v1707
    %v1932 = vpack.c.b16 %v1715, %v1708
    %v1933 = vpack.c.b16 %v1716, %v1709
    %v1934 = vpack.c.b16 %v1717, %v1710
    %v1935 = vpack.c.b16 %v1718, %v1711
    %v1936 = vpack.c.b16 %v1726, %v1719
    %v1937 = vpack.c.b16 %v1727, %v1720
    %v1938 = vpack.c.b16 %v1728, %v1721
    %v1939 = vpack.c.b16 %v1729, %v1722
    %v1940 = vpack.c.b16 %v1730, %v1723
    %v1941 = vpack.c.b16 %v1731, %v1724
    %v1942 = vpack.c.b16 %v1732, %v1725
    %v1943 = vpack.c.b16 %v1740, %v1733
    %v1944 = vpack.c.b16 %v1741, %v1734
    %v1945 = vpack.c.b16 %v1742, %v1735
    %v1946 = vpack.c.b16 %v1743, %v1736
    %v1947 = vpack.c.b16 %v1744, %v1737
    %v1948 = vpack.c.b16 %v1745, %v1738
    %v1949 = vpack.c.b16 %v1746, %v1739
    %v1950 = vpack.c.b16 %v1754, %v1747
    %v1951 = vpack.c.b16 %v1755, %v1748
    %v1952 = vpack.c.b16 %v1756, %v1749
    %v1953 = vpack.c.b16 %v1757, %v1750
    %v1954 = vpack.c.b16 %v1758, %v1751
    %v1955 = vpack.c.b16 %v1759, %v1752
    %v1956 = vpack.c.b16 %v1760, %v1753
    %v1957 = vpack.c.b16 %v1768, %v1761
    %v1958 = vpack.c.b16 %v1769, %v1762
    %v1959 = vpack.c.b16 %v1770, %v1763
    %v1960 = vpack.c.b16 %v1771, %v1764
    %v1961 = vpack.c.b16 %v1772, %v1765
    %v1962 = vpack.c.b16 %v1773, %v1766
    %v1963 = vpack.c.b16 %v1774, %v1767
    %v1964 = vpack.c.b16 %v1782, %v1775
    %v1965 = vpack.c.b16 %v1783, %v1776
    %v1966 = vpack.c.b16 %v1784, %v1777
    %v1967 = vpack.c.b16 %v1785, %v1778
    %v1968 = vpack.c.b16 %v1786, %v1779
    %v1969 = vpack.c.b16 %v1787, %v1780
    %v1970 = vpack.c.b16 %v1788, %v1781
    %v1971 = vpack.c.b16 %v1796, %v1789
    %v1972 = vpack.c.b16 %v1797, %v1790
    %v1973 = vpack.c.b16 %v1798, %v1791
    %v1974 = vpack.c.b16 %v1799, %v1792
    %v1975 = vpack.c.b16 %v1800, %v1793
    %v1976 = vpack.c.b16 %v1801, %v1794
    %v1977 = vpack.c.b16 %v1802, %v1795
    %v2154 = vsel %vm840, %v1015, 0
    %2156 = vmatprep.subr.bf16.mxu0 %v1853
    %2157 = vmatpush1.bf16.msra.mxu0 %v1852
    %2158 = vmatprep.subr.bf16.mxu0 %v1846
    %2159 = vmatpush1.bf16.msra.mxu0 %v1845
    %2160 = vmatprep.subr.bf16.mxu0 %v1839
    %2161 = vmatpush1.bf16.msra.mxu0 %v1838
    %2162 = vmatprep.subr.bf16.mxu0 %v1832
    %2163 = vmatpush1.bf16.msra.mxu0 %v1831
    %2164 = vmatprep.subr.bf16.mxu0 %v1825
    %2165 = vmatpush1.bf16.msra.mxu0 %v1824
    %2166 = vmatprep.subr.bf16.mxu0 %v1818
    %2167 = vmatpush1.bf16.msra.mxu0 %v1817
    %2168 = vmatprep.subr.bf16.mxu0 %v1811
    %2169 = vmatpush1.bf16.msra.mxu0 %v1810
    %2170 = vmatprep.subr.bf16.mxu0 %v1804
    %2171 = vmatpush1.bf16.msra.mxu0 %v1803
    %2172 = vmatprep.subr.bf16.mxu0 %v1909
    %2173 = vmatpush2.bf16.msra.mxu0 %v1908
    %2174 = vmatprep.subr.bf16.mxu0 %v1902
    %2175 = vmatpush2.bf16.msra.mxu0 %v1901
    %2176 = vmatprep.subr.bf16.mxu0 %v1895
    %2177 = vmatpush2.bf16.msra.mxu0 %v1894
    %2178 = vmatprep.subr.bf16.mxu0 %v1888
    %2179 = vmatpush2.bf16.msra.mxu0 %v1887
    %2180 = vmatprep.subr.bf16.mxu0 %v1881
    %2181 = vmatpush2.bf16.msra.mxu0 %v1880
    %2182 = vmatprep.subr.bf16.mxu0 %v1874
    %2183 = vmatpush2.bf16.msra.mxu0 %v1873
    %2184 = vmatprep.subr.bf16.mxu0 %v1867
    %2185 = vmatpush2.bf16.msra.mxu0 %v1866
    %2186 = vmatprep.subr.bf16.mxu0 %v1860
    %2187 = vmatpush2.bf16.msra.mxu0 %v1859
    %2188 = vmatprep.mubr.bf16.mxu0 %v1013
    %2189 = vmatmul.mubr.bf16.gmra.mxu0 %v1012
    %v2190 = vpop.f32.mrf.mxu0
    %v2191 = vadd.f32 %v1221, %v2190
    %v2192 = vpop.f32.mrf.mxu0
    %v2193 = vadd.f32 %v1225, %v2192
    %v2194 = vpop.f32.mrf.mxu0
    %v2195 = vpop.f32.mrf.mxu0
    %2196 = vdwg.mxu0
    %2197 = vmatprep.subr.bf16.mxu0 %v1965
    %2198 = vmatpush1.bf16.msra.mxu0 %v1964
    %2199 = vmatprep.subr.bf16.mxu0 %v1958
    %2200 = vmatpush1.bf16.msra.mxu0 %v1957
    %2201 = vmatprep.subr.bf16.mxu0 %v1951
    %2202 = vmatpush1.bf16.msra.mxu0 %v1950
    %2203 = vmatprep.subr.bf16.mxu0 %v1944
    %2204 = vmatpush1.bf16.msra.mxu0 %v1943
    %2205 = vmatprep.subr.bf16.mxu0 %v1937
    %2206 = vmatpush1.bf16.msra.mxu0 %v1936
    %2207 = vmatprep.subr.bf16.mxu0 %v1930
    %2208 = vmatpush1.bf16.msra.mxu0 %v1929
    %2209 = vmatprep.subr.bf16.mxu0 %v1923
    %2210 = vmatpush1.bf16.msra.mxu0 %v1922
    %2211 = vmatprep.subr.bf16.mxu0 %v1916
    %2212 = vmatpush1.bf16.msra.mxu0 %v1915
    %2213 = vmatprep.subr.bf16.mxu0 0
    %2214 = vmatpush2.bf16.msra.mxu0 0
    %2215 = vmatprep.subr.bf16.mxu0 0
    %2216 = vmatpush2.bf16.msra.mxu0 0
    %2217 = vmatprep.subr.bf16.mxu0 0
    %2218 = vmatpush2.bf16.msra.mxu0 0
    %2219 = vmatprep.subr.bf16.mxu0 0
    %2220 = vmatpush2.bf16.msra.mxu0 0
    %2221 = vmatprep.subr.bf16.mxu0 0
    %2222 = vmatpush2.bf16.msra.mxu0 0
    %2223 = vmatprep.subr.bf16.mxu0 0
    %2224 = vmatpush2.bf16.msra.mxu0 0
    %2225 = vmatprep.subr.bf16.mxu0 0
    %2226 = vmatpush2.bf16.msra.mxu0 0
    %2227 = vmatprep.subr.bf16.mxu0 %v1972
    %2228 = vmatpush2.bf16.msra.mxu0 %v1971
    %2229 = vmatprep.mubr.bf16.mxu0 %v2154
    %2230 = vmatmul.mubr.bf16.gmra.mxu0 %v1014
    %v2231 = vpop.f32.mrf.mxu0
    %v2232 = vadd.f32 %v2191, %v2231
    %v2233 = vpop.f32.mrf.mxu0
    %v2234 = vadd.f32 %v2193, %v2233
    %v2235 = vpop.f32.mrf.mxu0
    %v2236 = vpop.f32.mrf.mxu0
    %2237 = vdwg.mxu0
    %2238 = vmatprep.subr.bf16.mxu0 %v1855
    %2239 = vmatpush1.bf16.msra.mxu0 %v1854
    %2240 = vmatprep.subr.bf16.mxu0 %v1848
    %2241 = vmatpush1.bf16.msra.mxu0 %v1847
    %2242 = vmatprep.subr.bf16.mxu0 %v1841
    %2243 = vmatpush1.bf16.msra.mxu0 %v1840
    %2244 = vmatprep.subr.bf16.mxu0 %v1834
    %2245 = vmatpush1.bf16.msra.mxu0 %v1833
    %2246 = vmatprep.subr.bf16.mxu0 %v1827
    %2247 = vmatpush1.bf16.msra.mxu0 %v1826
    %2248 = vmatprep.subr.bf16.mxu0 %v1820
    %2249 = vmatpush1.bf16.msra.mxu0 %v1819
    %2250 = vmatprep.subr.bf16.mxu0 %v1813
    %2251 = vmatpush1.bf16.msra.mxu0 %v1812
    %2252 = vmatprep.subr.bf16.mxu0 %v1806
    %2253 = vmatpush1.bf16.msra.mxu0 %v1805
    %2254 = vmatprep.subr.bf16.mxu0 %v1911
    %2255 = vmatpush2.bf16.msra.mxu0 %v1910
    %2256 = vmatprep.subr.bf16.mxu0 %v1904
    %2257 = vmatpush2.bf16.msra.mxu0 %v1903
    %2258 = vmatprep.subr.bf16.mxu0 %v1897
    %2259 = vmatpush2.bf16.msra.mxu0 %v1896
    %2260 = vmatprep.subr.bf16.mxu0 %v1890
    %2261 = vmatpush2.bf16.msra.mxu0 %v1889
    %2262 = vmatprep.subr.bf16.mxu0 %v1883
    %2263 = vmatpush2.bf16.msra.mxu0 %v1882
    %2264 = vmatprep.subr.bf16.mxu0 %v1876
    %2265 = vmatpush2.bf16.msra.mxu0 %v1875
    %2266 = vmatprep.subr.bf16.mxu0 %v1869
    %2267 = vmatpush2.bf16.msra.mxu0 %v1868
    %2268 = vmatprep.subr.bf16.mxu0 %v1862
    %2269 = vmatpush2.bf16.msra.mxu0 %v1861
    %2270 = vmatprep.mubr.bf16.mxu0 %v1013
    %2271 = vmatmul.mubr.bf16.gmra.mxu0 %v1012
    %v2272 = vpop.f32.mrf.mxu0
    %v2273 = vadd.f32 %v1229, %v2272
    %v2274 = vpop.f32.mrf.mxu0
    %v2275 = vadd.f32 %v1233, %v2274
    %v2276 = vpop.f32.mrf.mxu0
    %v2277 = vpop.f32.mrf.mxu0
    %2278 = vdwg.mxu0
    %2279 = vmatprep.subr.bf16.mxu0 %v1967
    %2280 = vmatpush1.bf16.msra.mxu0 %v1966
    %2281 = vmatprep.subr.bf16.mxu0 %v1960
    %2282 = vmatpush1.bf16.msra.mxu0 %v1959
    %2283 = vmatprep.subr.bf16.mxu0 %v1953
    %2284 = vmatpush1.bf16.msra.mxu0 %v1952
    %2285 = vmatprep.subr.bf16.mxu0 %v1946
    %2286 = vmatpush1.bf16.msra.mxu0 %v1945
    %2287 = vmatprep.subr.bf16.mxu0 %v1939
    %2288 = vmatpush1.bf16.msra.mxu0 %v1938
    %2289 = vmatprep.subr.bf16.mxu0 %v1932
    %2290 = vmatpush1.bf16.msra.mxu0 %v1931
    %2291 = vmatprep.subr.bf16.mxu0 %v1925
    %2292 = vmatpush1.bf16.msra.mxu0 %v1924
    %2293 = vmatprep.subr.bf16.mxu0 %v1918
    %2294 = vmatpush1.bf16.msra.mxu0 %v1917
    %2295 = vmatprep.subr.bf16.mxu0 0
    %2296 = vmatpush2.bf16.msra.mxu0 0
    %2297 = vmatprep.subr.bf16.mxu0 0
    %2298 = vmatpush2.bf16.msra.mxu0 0
    %2299 = vmatprep.subr.bf16.mxu0 0
    %2300 = vmatpush2.bf16.msra.mxu0 0
    %2301 = vmatprep.subr.bf16.mxu0 0
    %2302 = vmatpush2.bf16.msra.mxu0 0
    %2303 = vmatprep.subr.bf16.mxu0 0
    %2304 = vmatpush2.bf16.msra.mxu0 0
    %2305 = vmatprep.subr.bf16.mxu0 0
    %2306 = vmatpush2.bf16.msra.mxu0 0
    %2307 = vmatprep.subr.bf16.mxu0 0
    %2308 = vmatpush2.bf16.msra.mxu0 0
    %2309 = vmatprep.subr.bf16.mxu0 %v1974
    %2310 = vmatpush2.bf16.msra.mxu0 %v1973
    %2311 = vmatprep.mubr.bf16.mxu0 %v2154
    %2312 = vmatmul.mubr.bf16.gmra.mxu0 %v1014
    %v2313 = vpop.f32.mrf.mxu0
    %v2314 = vadd.f32 %v2273, %v2313
    %v2315 = vpop.f32.mrf.mxu0
    %v2316 = vadd.f32 %v2275, %v2315
    %v2317 = vpop.f32.mrf.mxu0
    %v2318 = vpop.f32.mrf.mxu0
    %2319 = vdwg.mxu0
    %2320 = vmatprep.subr.bf16.mxu0 %v1857
    %2321 = vmatpush1.bf16.msra.mxu0 %v1856
    %2322 = vmatprep.subr.bf16.mxu0 %v1850
    %2323 = vmatpush1.bf16.msra.mxu0 %v1849
    %2324 = vmatprep.subr.bf16.mxu0 %v1843
    %2325 = vmatpush1.bf16.msra.mxu0 %v1842
    %2326 = vmatprep.subr.bf16.mxu0 %v1836
    %2327 = vmatpush1.bf16.msra.mxu0 %v1835
    %2328 = vmatprep.subr.bf16.mxu0 %v1829
    %2329 = vmatpush1.bf16.msra.mxu0 %v1828
    %2330 = vmatprep.subr.bf16.mxu0 %v1822
    %2331 = vmatpush1.bf16.msra.mxu0 %v1821
    %2332 = vmatprep.subr.bf16.mxu0 %v1815
    %2333 = vmatpush1.bf16.msra.mxu0 %v1814
    %2334 = vmatprep.subr.bf16.mxu0 %v1808
    %2335 = vmatpush1.bf16.msra.mxu0 %v1807
    %2336 = vmatprep.subr.bf16.mxu0 %v1913
    %2337 = vmatpush2.bf16.msra.mxu0 %v1912
    %2338 = vmatprep.subr.bf16.mxu0 %v1906
    %2339 = vmatpush2.bf16.msra.mxu0 %v1905
    %2340 = vmatprep.subr.bf16.mxu0 %v1899
    %2341 = vmatpush2.bf16.msra.mxu0 %v1898
    %2342 = vmatprep.subr.bf16.mxu0 %v1892
    %2343 = vmatpush2.bf16.msra.mxu0 %v1891
    %2344 = vmatprep.subr.bf16.mxu0 %v1885
    %2345 = vmatpush2.bf16.msra.mxu0 %v1884
    %2346 = vmatprep.subr.bf16.mxu0 %v1878
    %2347 = vmatpush2.bf16.msra.mxu0 %v1877
    %2348 = vmatprep.subr.bf16.mxu0 %v1871
    %2349 = vmatpush2.bf16.msra.mxu0 %v1870
    %2350 = vmatprep.subr.bf16.mxu0 %v1864
    %2351 = vmatpush2.bf16.msra.mxu0 %v1863
    %2352 = vmatprep.mubr.bf16.mxu0 %v1013
    %2353 = vmatmul.mubr.bf16.gmra.mxu0 %v1012
    %v2354 = vpop.f32.mrf.mxu0
    %v2355 = vadd.f32 %v1237, %v2354
    %v2356 = vpop.f32.mrf.mxu0
    %v2357 = vadd.f32 %v1241, %v2356
    %v2358 = vpop.f32.mrf.mxu0
    %v2359 = vpop.f32.mrf.mxu0
    %2360 = vdwg.mxu0
    %2361 = vmatprep.subr.bf16.mxu0 %v1969
    %2362 = vmatpush1.bf16.msra.mxu0 %v1968
    %2363 = vmatprep.subr.bf16.mxu0 %v1962
    %2364 = vmatpush1.bf16.msra.mxu0 %v1961
    %2365 = vmatprep.subr.bf16.mxu0 %v1955
    %2366 = vmatpush1.bf16.msra.mxu0 %v1954
    %2367 = vmatprep.subr.bf16.mxu0 %v1948
    %2368 = vmatpush1.bf16.msra.mxu0 %v1947
    %2369 = vmatprep.subr.bf16.mxu0 %v1941
    %2370 = vmatpush1.bf16.msra.mxu0 %v1940
    %2371 = vmatprep.subr.bf16.mxu0 %v1934
    %2372 = vmatpush1.bf16.msra.mxu0 %v1933
    %2373 = vmatprep.subr.bf16.mxu0 %v1927
    %2374 = vmatpush1.bf16.msra.mxu0 %v1926
    %2375 = vmatprep.subr.bf16.mxu0 %v1920
    %2376 = vmatpush1.bf16.msra.mxu0 %v1919
    %2377 = vmatprep.subr.bf16.mxu0 0
    %2378 = vmatpush2.bf16.msra.mxu0 0
    %2379 = vmatprep.subr.bf16.mxu0 0
    %2380 = vmatpush2.bf16.msra.mxu0 0
    %2381 = vmatprep.subr.bf16.mxu0 0
    %2382 = vmatpush2.bf16.msra.mxu0 0
    %2383 = vmatprep.subr.bf16.mxu0 0
    %2384 = vmatpush2.bf16.msra.mxu0 0
    %2385 = vmatprep.subr.bf16.mxu0 0
    %2386 = vmatpush2.bf16.msra.mxu0 0
    %2387 = vmatprep.subr.bf16.mxu0 0
    %2388 = vmatpush2.bf16.msra.mxu0 0
    %2389 = vmatprep.subr.bf16.mxu0 0
    %2390 = vmatpush2.bf16.msra.mxu0 0
    %2391 = vmatprep.subr.bf16.mxu0 %v1976
    %2392 = vmatpush2.bf16.msra.mxu0 %v1975
    %2393 = vmatprep.mubr.bf16.mxu0 %v2154
    %2394 = vmatmul.mubr.bf16.gmra.mxu0 %v1014
    %v2395 = vpop.f32.mrf.mxu0
    %v2396 = vadd.f32 %v2355, %v2395
    %v2397 = vpop.f32.mrf.mxu0
    %v2398 = vadd.f32 %v2357, %v2397
    %v2399 = vpop.f32.mrf.mxu0
    %v2400 = vpop.f32.mrf.mxu0
    %2401 = vdwg.mxu0
    %2402 = vmatprep.subr.bf16.mxu0 0
    %2403 = vmatpush1.bf16.msra.mxu0 %v1858
    %2404 = vmatprep.subr.bf16.mxu0 0
    %2405 = vmatpush1.bf16.msra.mxu0 %v1851
    %2406 = vmatprep.subr.bf16.mxu0 0
    %2407 = vmatpush1.bf16.msra.mxu0 %v1844
    %2408 = vmatprep.subr.bf16.mxu0 0
    %2409 = vmatpush1.bf16.msra.mxu0 %v1837
    %2410 = vmatprep.subr.bf16.mxu0 0
    %2411 = vmatpush1.bf16.msra.mxu0 %v1830
    %2412 = vmatprep.subr.bf16.mxu0 0
    %2413 = vmatpush1.bf16.msra.mxu0 %v1823
    %2414 = vmatprep.subr.bf16.mxu0 0
    %2415 = vmatpush1.bf16.msra.mxu0 %v1816
    %2416 = vmatprep.subr.bf16.mxu0 0
    %2417 = vmatpush1.bf16.msra.mxu0 %v1809
    %2418 = vmatprep.subr.bf16.mxu0 0
    %2419 = vmatpush2.bf16.msra.mxu0 %v1914
    %2420 = vmatprep.subr.bf16.mxu0 0
    %2421 = vmatpush2.bf16.msra.mxu0 %v1907
    %2422 = vmatprep.subr.bf16.mxu0 0
    %2423 = vmatpush2.bf16.msra.mxu0 %v1900
    %2424 = vmatprep.subr.bf16.mxu0 0
    %2425 = vmatpush2.bf16.msra.mxu0 %v1893
    %2426 = vmatprep.subr.bf16.mxu0 0
    %2427 = vmatpush2.bf16.msra.mxu0 %v1886
    %2428 = vmatprep.subr.bf16.mxu0 0
    %2429 = vmatpush2.bf16.msra.mxu0 %v1879
    %2430 = vmatprep.subr.bf16.mxu0 0
    %2431 = vmatpush2.bf16.msra.mxu0 %v1872
    %2432 = vmatprep.subr.bf16.mxu0 0
    %2433 = vmatpush2.bf16.msra.mxu0 %v1865
    %2434 = vmatprep.mubr.bf16.mxu0 %v1013
    %2435 = vmatmul.mubr.bf16.gmra.mxu0 %v1012
    %v2436 = vpop.f32.mrf.mxu0
    %v2437 = vadd.f32 %v1245, %v2436
    %v2438 = vpop.f32.mrf.mxu0
    %v2439 = vpop.f32.mrf.mxu0
    %v2440 = vpop.f32.mrf.mxu0
    %2441 = vdwg.mxu0
    %2442 = vmatprep.subr.bf16.mxu0 0
    %2443 = vmatpush1.bf16.msra.mxu0 %v1970
    %2444 = vmatprep.subr.bf16.mxu0 0
    %2445 = vmatpush1.bf16.msra.mxu0 %v1963
    %2446 = vmatprep.subr.bf16.mxu0 0
    %2447 = vmatpush1.bf16.msra.mxu0 %v1956
    %2448 = vmatprep.subr.bf16.mxu0 0
    %2449 = vmatpush1.bf16.msra.mxu0 %v1949
    %2450 = vmatprep.subr.bf16.mxu0 0
    %2451 = vmatpush1.bf16.msra.mxu0 %v1942
    %2452 = vmatprep.subr.bf16.mxu0 0
    %2453 = vmatpush1.bf16.msra.mxu0 %v1935
    %2454 = vmatprep.subr.bf16.mxu0 0
    %2455 = vmatpush1.bf16.msra.mxu0 %v1928
    %2456 = vmatprep.subr.bf16.mxu0 0
    %2457 = vmatpush1.bf16.msra.mxu0 %v1921
    %2458 = vmatprep.subr.bf16.mxu0 0
    %2459 = vmatpush2.bf16.msra.mxu0 0
    %2460 = vmatprep.subr.bf16.mxu0 0
    %2461 = vmatpush2.bf16.msra.mxu0 0
    %2462 = vmatprep.subr.bf16.mxu0 0
    %2463 = vmatpush2.bf16.msra.mxu0 0
    %2464 = vmatprep.subr.bf16.mxu0 0
    %2465 = vmatpush2.bf16.msra.mxu0 0
    %2466 = vmatprep.subr.bf16.mxu0 0
    %2467 = vmatpush2.bf16.msra.mxu0 0
    %2468 = vmatprep.subr.bf16.mxu0 0
    %2469 = vmatpush2.bf16.msra.mxu0 0
    %2470 = vmatprep.subr.bf16.mxu0 0
    %2471 = vmatpush2.bf16.msra.mxu0 0
    %2472 = vmatprep.subr.bf16.mxu0 0
    %2473 = vmatpush2.bf16.msra.mxu0 %v1977
    %2474 = vmatprep.mubr.bf16.mxu0 %v2154
    %2475 = vmatmul.mubr.bf16.gmra.mxu0 %v1014
    %v2476 = vpop.f32.mrf.mxu0
    %v2477 = vadd.f32 %v2437, %v2476
    %v2478 = vpop.f32.mrf.mxu0
    %v2479 = vpop.f32.mrf.mxu0
    %v2480 = vpop.f32.mrf.mxu0
    %2481 = vdwg.mxu0
    %v2482 = vsub.f32 0.0, %v2232
    %v2483 = vsub.f32 0.0, %v2234
    %v2484 = vsub.f32 0.0, %v2314
    %v2485 = vsub.f32 0.0, %v2316
    %v2486 = vsub.f32 0.0, %v2396
    %v2487 = vsub.f32 0.0, %v2398
    %v2488 = vsub.f32 0.0, %v2477
    %v2489 = vmul.f32 %v2482, 1.442695
    %v2490 = vpow.pop %v2489
    %v2491 = vmul.f32 %v2483, 1.442695
    %v2492 = vpow.pop %v2491
    %v2493 = vmul.f32 %v2484, 1.442695
    %v2494 = vpow.pop %v2493
    %v2495 = vmul.f32 %v2485, 1.442695
    %v2496 = vpow.pop %v2495
    %v2497 = vmul.f32 %v2486, 1.442695
    %v2498 = vpow.pop %v2497
    %v2499 = vmul.f32 %v2487, 1.442695
    %v2500 = vpow.pop %v2499
    %v2501 = vmul.f32 %v2488, 1.442695
    %v2502 = vpow.pop %v2501
    %v2503 = vadd.f32 %v2490, 1.0
    %v2504 = vadd.f32 %v2492, 1.0
    %v2505 = vadd.f32 %v2494, 1.0
    %v2506 = vadd.f32 %v2496, 1.0
    %v2507 = vadd.f32 %v2498, 1.0
    %v2508 = vadd.f32 %v2500, 1.0
    %v2509 = vadd.f32 %v2502, 1.0
    %v2510 = vrcp.pop %v2503
    %v2511 = vrcp.pop %v2504
    %v2512 = vrcp.pop %v2505
    %v2513 = vrcp.pop %v2506
    %v2514 = vrcp.pop %v2507
    %v2515 = vrcp.pop %v2508
    %v2516 = vrcp.pop %v2509
    %2517 = vst [vmem:[%s7] sm:$0xff] %v2510
    %2518 = vst [vmem:[%s7 + $0x8] sm:$0xff] %v2511
    %2519 = vst [vmem:[%s7 + $0x10] sm:$0xff] %v2512
    %2520 = vst [vmem:[%s7 + $0x18] sm:$0xff] %v2513
    %2521 = vst [vmem:[%s7 + $0x20] sm:$0xff] %v2514
    %2522 = vst [vmem:[%s7 + $0x28] sm:$0xff] %v2515
    %2523 = vst.msk [vmem:[%s7 + $0x30] sm:$0xff] %vm840, %v2516
    // Predicated region
    $region42: #{decoder_mlp_forward.1} parent=1 // pred_check
      _
    $region43: #{decoder_mlp_forward.1} parent=1 // pred_check_branch
      %2525 = sbr.rel (0) target = $region45
    $region44: #{decoder_mlp_forward.1} parent=1 // pred_region
      _
    $region45: #{decoder_mlp_forward.1} parent=1 // pred_fallthru
      _
    // Predicated region
    $region46: #{decoder_mlp_forward.1} parent=1 // pred_check
      _
    $region47: #{decoder_mlp_forward.1} parent=1 // pred_check_branch
      %2527 = sbr.rel (0) target = $region49
    $region48: #{decoder_mlp_forward.1} parent=1 // pred_region
      _
    $region49: #{decoder_mlp_forward.1} parent=1 // pred_fallthru
      _
    %2528 = vsyncpa [#allocation3], 1
    %2529 = vsyncpa [#allocation5], 1

</llo_original>
